<compile_context>
chip_gen: v7x
topology: tpu7x:2x2x1
jax: 0.10.0
libtpu: 0.0.40
codegen_flags: <defaults>
</compile_context>

<pallas_src>
import jax
import jax.numpy as jnp
from jax import lax
from jax.experimental import pallas as pl
from jax.experimental.pallas import tpu as pltpu


# ------------------------------ fused kernel ------------------------------- #

def fused_forward_kernel(x_ref, adj_ref, selmat_ref,
                         gcn_w_ref, gcn_b_ref,
                         wih_g_ref, wih_x_ref, whh_ref, b_ref,
                         mlp_w_ref, mlp_b_ref,
                         o_ref):
    """Entire Our_Model forward on one VMEM-resident tile set.

    x:      (B, S, N, F)         raw features
    adj:    (B, S, N, N)         dense binary adjacency (zero diagonal)
    selmat: (S*Bsel, B*S*N)      one-hot row-selection (select + permute), row
                                 r = t*Bsel + j picks node row b_j*S*N + t*N + n_j
    gcn_w:  (F, GC), gcn_b: (1, GC)
    wih_g:  (GC, 4*HH)           GCN-embedding -> fused gates (comb columns only)
    wih_x:  (F,  4*HH)           raw features  -> fused gates (comb + stock cols)
    whh:    (HH, 4*HH)           block-diagonal fused recurrent weights
    b:      (1, 4*HH)            fused bias (b_ih + b_hh of both LSTMs)
    mlp_w:  (HH, OUT), mlp_b: (1, OUT)
    o:      (S*Bsel, OUT)        log_softmax output, row t*Bsel + j
    """
    B, S, N, F = x_ref.shape
    G = B * S
    GC = gcn_w_ref.shape[1]
    HH = whh_ref.shape[0]
    SB = selmat_ref.shape[0]
    Bsel = SB // S

    # ---- GCN over all G = B*S graphs in one shot --------------------------
    x_flat = x_ref[...].reshape(G * N, F)                          # (G*N, F)
    xw = jnp.dot(x_flat, gcn_w_ref[...],
                 preferred_element_type=jnp.float32)               # (G*N, GC)
    xw = xw.reshape(G, N, GC)
    adj = adj_ref[...].reshape(G, N, N)
    deg = jnp.sum(adj, axis=-1, keepdims=True) + 1.0               # self-loop degree
    dis = lax.rsqrt(deg)                                           # (G, N, 1)
    u = xw * dis                                                   # D^-1/2 X W
    agg = jnp.einsum('gnm,gmc->gnc', adj, u,
                     preferred_element_type=jnp.float32) + u       # (A + I) u
    gcn = (dis * agg + gcn_b_ref[...]).reshape(G * N, GC)          # (G*N, GC)

    # ---- select-first: gather (as matmul) the narrow per-node tensors -----
    selmat = selmat_ref[...]                                       # (S*Bsel, G*N)
    sel_g = jnp.dot(selmat, gcn, preferred_element_type=jnp.float32)     # (S*Bsel, GC)
    sel_x = jnp.dot(selmat, x_flat, preferred_element_type=jnp.float32)  # (S*Bsel, F)

    # ---- hoisted, gate-fused LSTM input projection (both LSTMs at once) ---
    proj = (jnp.dot(sel_g, wih_g_ref[...], preferred_element_type=jnp.float32)
            + jnp.dot(sel_x, wih_x_ref[...], preferred_element_type=jnp.float32)
            + b_ref[...])                                          # (S*Bsel, 4*HH)

    # ---- fused dual-LSTM recurrence (statically unrolled, S is tiny) ------
    whh = whh_ref[...]                                             # hoisted
    h = jnp.zeros((Bsel, HH), jnp.float32)
    c = jnp.zeros((Bsel, HH), jnp.float32)
    hs = []
    for t in range(S):
        gates = proj[t * Bsel:(t + 1) * Bsel, :] + jnp.dot(
            h, whh, preferred_element_type=jnp.float32)            # (Bsel, 4*HH)
        i = jax.nn.sigmoid(gates[:, 0 * HH:1 * HH])
        f = jax.nn.sigmoid(gates[:, 1 * HH:2 * HH])
        g = jnp.tanh(gates[:, 2 * HH:3 * HH])
        o = jax.nn.sigmoid(gates[:, 3 * HH:4 * HH])
        c = f * c + i * g
        h = o * jnp.tanh(c)            # lanes [0:Hc]=comb_o, [Hc:HH]=stock_o
        hs.append(h)

    # ---- batched output MLP + log_softmax, single store --------------------
    hcat = jnp.concatenate(hs, axis=0)                             # (S*Bsel, HH), row t*Bsel+j
    logits = jnp.dot(hcat, mlp_w_ref[...],
                     preferred_element_type=jnp.float32) + mlp_b_ref[...]
    m = jnp.max(logits, axis=-1, keepdims=True)
    shifted = logits - m
    lse = jnp.log(jnp.sum(jnp.exp(shifted), axis=-1, keepdims=True))
    o_ref[...] = shifted - lse


# ------------------------------- wrapper ----------------------------------- #

@jax.jit
def our_model_forward(inputs, batch_seq_adj, select, params):
    """Mirrors Our_Model.forward with input_MLP=None, hidden_channels=None,
    num_lstm_layer=[1,1], recurrent_training=True."""
    B, S, N, F = inputs.shape
    OUT = params["mlp_w"].shape[1]
    Bsel = select.shape[0]

    # One-hot selection matrix: row (t*Bsel + j) picks flat node row
    # b_j*S*N + t*N + n_j of the (B*S*N, ...) per-node tensors
    # (== permute(0,2,1,3) + [select], per timestep).
    b_idx = select // N
    n_idx = select % N
    t_idx = jnp.arange(S, dtype=select.dtype)
    rows = (b_idx[None, :] * (S * N) + t_idx[:, None] * N + n_idx[None, :])   # (S, Bsel)
    sel_mat = jax.nn.one_hot(rows.reshape(S * Bsel), B * S * N,
                             dtype=jnp.float32)                                # (S*Bsel, B*S*N)

    vmem = lambda: pl.BlockSpec(memory_space=pltpu.MemorySpace.VMEM)
    out = pl.pallas_call(
        fused_forward_kernel,
        out_shape=jax.ShapeDtypeStruct((S * Bsel, OUT), jnp.float32),
        in_specs=[vmem() for _ in range(11)],
        out_specs=vmem(),
    )(inputs, batch_seq_adj, sel_mat,
      params["gcn_w"], params["gcn_b"],
      params["wih_g"], params["wih_x"], params["whh"], params["b"],
      params["mlp_w"], params["mlp_b"])

    # Kernel already produces PyTorch's permute(1,0,2).flatten(end_dim=1) order.
    return out


# --------------------- params: PyTorch layout + packing -------------------- #

def init_params_torch_layout(key, feat, graph_ch, h_comb, h_stock, out_ch):
    """Random parameters in PyTorch's native layouts (LSTM gate order [i,f,g,o])."""
    ks = jax.random.split(key, 12)

    def u(k, shape, fan):
        s = 1.0 / jnp.sqrt(jnp.float32(fan))
        return jax.random.uniform(k, shape, jnp.float32, -s, s)

    comb_in = graph_ch + feat
    return {
        "gcn.weight": u(ks[0], (graph_ch, feat), feat),            # (out, in)
        "gcn.bias": u(ks[1], (graph_ch,), feat),
        "comb.weight_ih": u(ks[2], (4 * h_comb, comb_in), h_comb),
        "comb.weight_hh": u(ks[3], (4 * h_comb, h_comb), h_comb),
        "comb.bias_ih": u(ks[4], (4 * h_comb,), h_comb),
        "comb.bias_hh": u(ks[5], (4 * h_comb,), h_comb),
        "stock.weight_ih": u(ks[6], (4 * h_stock, feat), h_stock),
        "stock.weight_hh": u(ks[7], (4 * h_stock, h_stock), h_stock),
        "stock.bias_ih": u(ks[8], (4 * h_stock,), h_stock),
        "stock.bias_hh": u(ks[9], (4 * h_stock,), h_stock),
        "mlp.weight": u(ks[10], (out_ch, h_comb + h_stock), h_comb + h_stock),
        "mlp.bias": u(ks[11], (out_ch,), h_comb + h_stock),
    }


def _scatter_gates(w, h, hh, offset):
    """Place each [i|f|g|o] block (width h) of w:(Din, 4h) at columns
    [k*hh + offset : k*hh + offset + h] of a zero (Din, 4*hh) matrix."""
    out = jnp.zeros((w.shape[0], 4 * hh), w.dtype)
    for k in range(4):
        out = out.at[:, k * hh + offset:k * hh + offset + h].set(
            w[:, k * h:(k + 1) * h])
    return out


def pack_params(tp, feat, graph_ch, h_comb, h_stock):
    """Pack PyTorch-layout params into the fused-kernel layout.

    Fused gate layout: 4 blocks [i|f|g|o] of width HH = h_comb + h_stock; inside
    each block the first h_comb lanes are the comb LSTM, the rest the stock LSTM.
    W_hh is block-diagonal so one matmul drives both recurrences exactly.
    """
    hh = h_comb + h_stock
    comb_wih_p = _scatter_gates(tp["comb.weight_ih"].T, h_comb, hh, 0)          # (GC+F, 4HH)
    stock_wih_p = _scatter_gates(tp["stock.weight_ih"].T, h_stock, hh, h_comb)  # (F, 4HH)
    whh = jnp.concatenate(
        [_scatter_gates(tp["comb.weight_hh"].T, h_comb, hh, 0),
         _scatter_gates(tp["stock.weight_hh"].T, h_stock, hh, h_comb)], axis=0)  # (HH, 4HH)
    b_comb = (tp["comb.bias_ih"] + tp["comb.bias_hh"])[None, :]
    b_stock = (tp["stock.bias_ih"] + tp["stock.bias_hh"])[None, :]
    b = (_scatter_gates(b_comb, h_comb, hh, 0)
         + _scatter_gates(b_stock, h_stock, hh, h_comb))                         # (1, 4HH)
    return {
        "gcn_w": tp["gcn.weight"].T,                    # (F, GC)
        "gcn_b": tp["gcn.bias"][None, :],               # (1, GC)
        "wih_g": comb_wih_p[:graph_ch],                 # GCN embedding -> gates
        "wih_x": comb_wih_p[graph_ch:] + stock_wih_p,   # raw features  -> gates
        "whh": whh,
        "b": b,
        "mlp_w": tp["mlp.weight"].T,                    # (HH, OUT)
        "mlp_b": tp["mlp.bias"][None, :],               # (1, OUT)
    }


# ------------------------- pure-JAX reference model ------------------------ #

def reference_forward(inputs, adj, select, tp):
    """Straightforward jnp transcription of the PyTorch module (for validation)."""
    B, S, N, F = inputs.shape
    GC = tp["gcn.weight"].shape[0]

    def lstm(x, wih, whh, bih, bhh):                    # x: (Bsel, S, Din)
        Bb = x.shape[0]
        H = whh.shape[1]
        h = jnp.zeros((Bb, H), jnp.float32)
        c = jnp.zeros((Bb, H), jnp.float32)
        outs = []
        for t in range(x.shape[1]):
            gates = x[:, t] @ wih.T + h @ whh.T + bih + bhh
            i = jax.nn.sigmoid(gates[:, 0:H])
            f = jax.nn.sigmoid(gates[:, H:2 * H])
            g = jnp.tanh(gates[:, 2 * H:3 * H])
            o = jax.nn.sigmoid(gates[:, 3 * H:4 * H])
            c = f * c + i * g
            h = o * jnp.tanh(c)
            outs.append(h)
        return jnp.stack(outs, axis=1)                  # (Bsel, S, H)

    x_g = inputs.reshape(B * S, N, F)
    a = adj.reshape(B * S, N, N)
    a_hat = a + jnp.eye(N, dtype=jnp.float32)
    dis = 1.0 / jnp.sqrt(a_hat.sum(-1))
    norm = a_hat * dis[:, :, None] * dis[:, None, :]
    gcn = jnp.einsum('gnm,gmf,fc->gnc', norm, x_g, tp["gcn.weight"].T) + tp["gcn.bias"]

    stock_in = inputs.transpose(0, 2, 1, 3).reshape(B * N, S, F)[select]
    stock_o = lstm(stock_in, tp["stock.weight_ih"], tp["stock.weight_hh"],
                   tp["stock.bias_ih"], tp["stock.bias_hh"])

    emb = jnp.concatenate([gcn, x_g], axis=-1).reshape(B, S, N, GC + F)
    emb = emb.transpose(0, 2, 1, 3).reshape(B * N, S, GC + F)[select]
    comb_o = lstm(emb, tp["comb.weight_ih"], tp["comb.weight_hh"],
                  tp["comb.bias_ih"], tp["comb.bias_hh"])

    out = jnp.concatenate([comb_o, stock_o], axis=-1)               # (Bsel, S, HH)
    logits = out @ tp["mlp.weight"].T + tp["mlp.bias"]              # (Bsel, S, OUT)
    logits = jnp.transpose(logits, (1, 0, 2)).reshape(S * select.shape[0], -1)
    return jax.nn.log_softmax(logits, axis=-1)


# ---------------------------------- main ----------------------------------- #

if __name__ == "__main__":
    B, S, N, F = 2, 4, 8, 8          # batch, seq, num_stocks, feature_size
    GC = 16                          # graph_channel
    H_COMB, H_STOCK = 16, 16         # lstm_out_channel
    OUT_CH = 8                       # out_channel

    key = jax.random.PRNGKey(0)
    k_in, k_adj, k_par = jax.random.split(key, 3)

    inputs = jax.random.normal(k_in, (B, S, N, F), jnp.float32)

    # symmetric binary adjacency, zero diagonal (dense_to_sparse drops weights)
    a = jax.random.bernoulli(k_adj, 0.3, (B, S, N, N)).astype(jnp.float32)
    a = jnp.maximum(a, jnp.swapaxes(a, -1, -2))
    batch_seq_adj = a * (1.0 - jnp.eye(N, dtype=jnp.float32))

    # subset of the B*N flattened (batch, stock) rows
    select = jnp.array([0, 1, 2, 5, 7, 8, 10, 12, 14, 15], dtype=jnp.int32)

    torch_params = init_params_torch_layout(k_par, F, GC, H_COMB, H_STOCK, OUT_CH)
    params = pack_params(torch_params, F, GC, H_COMB, H_STOCK)

    out = jax.block_until_ready(our_model_forward(inputs, batch_seq_adj, select, params))

    expected_rows = S * select.shape[0]
    assert out.shape == (expected_rows, OUT_CH), out.shape
    assert bool(jnp.all(jnp.isfinite(out)))
    # rows of log_softmax must exponentiate-sum to ~1
    assert bool(jnp.allclose(jnp.sum(jnp.exp(out), axis=1), 1.0, atol=1e-4))

    # validate the fused kernel against a plain-JAX transcription of the module
    ref = jax.block_until_ready(reference_forward(inputs, batch_seq_adj, select,
                                                  torch_params))
    max_err = float(jnp.max(jnp.abs(out - ref)))
    assert max_err < 2e-2, f"mismatch vs reference: {max_err}"

    print("KERNEL_OK")
</pallas_src>

<mosaic_0001>
module attributes {stable_mosaic.version = 11 : i64} {
  func.func @fused_forward_kernel(%arg0: memref<2x4x8x8xf32, #tpu.memory_space<vmem>>, %arg1: memref<2x4x8x8xf32, #tpu.memory_space<vmem>>, %arg2: memref<40x64xf32, #tpu.memory_space<vmem>>, %arg3: memref<8x16xf32, #tpu.memory_space<vmem>>, %arg4: memref<1x16xf32, #tpu.memory_space<vmem>>, %arg5: memref<16x128xf32, #tpu.memory_space<vmem>>, %arg6: memref<8x128xf32, #tpu.memory_space<vmem>>, %arg7: memref<32x128xf32, #tpu.memory_space<vmem>>, %arg8: memref<1x128xf32, #tpu.memory_space<vmem>>, %arg9: memref<32x8xf32, #tpu.memory_space<vmem>>, %arg10: memref<1x8xf32, #tpu.memory_space<vmem>>, %arg11: memref<40x8xf32, #tpu.memory_space<vmem>>) attributes {dimension_semantics = [], scalar_prefetch = 0 : i64, scratch_operands = 0 : i64, tpu.core_type = #tpu.core_type<tc>} {
    %c0 = arith.constant 0 : index
    %c0_0 = arith.constant 0 : index
    %c0_1 = arith.constant 0 : index
    %c0_2 = arith.constant 0 : index
    %0 = vector.load %arg0[%c0, %c0_0, %c0_1, %c0_2] : memref<2x4x8x8xf32, #tpu.memory_space<vmem>>, vector<2x4x8x8xf32>
    %1 = vector.shape_cast %0 : vector<2x4x8x8xf32> to vector<64x8xf32>
    %c0_3 = arith.constant 0 : index
    %c0_4 = arith.constant 0 : index
    %2 = vector.load %arg3[%c0_3, %c0_4] : memref<8x16xf32, #tpu.memory_space<vmem>>, vector<8x16xf32>
    %cst = arith.constant dense<0.000000e+00> : vector<64x16xf32>
    %3 = tpu.matmul %1, %2, %cst {dimension_numbers = #tpu.dot_dimension_numbers<[1], [0], [0], [1], [0, 0, 1, 1], [], []>} : vector<64x8xf32>, vector<8x16xf32>, vector<64x16xf32> -> vector<64x16xf32>
    %4 = vector.shape_cast %3 : vector<64x16xf32> to vector<8x8x16xf32>
    %c0_5 = arith.constant 0 : index
    %c0_6 = arith.constant 0 : index
    %c0_7 = arith.constant 0 : index
    %c0_8 = arith.constant 0 : index
    %5 = vector.load %arg1[%c0_5, %c0_6, %c0_7, %c0_8] : memref<2x4x8x8xf32, #tpu.memory_space<vmem>>, vector<2x4x8x8xf32>
    %6 = vector.shape_cast %5 : vector<2x4x8x8xf32> to vector<8x8x8xf32>
    %cst_9 = arith.constant dense<0.000000e+00> : vector<8x8xf32>
    %7 = vector.multi_reduction <add>, %6, %cst_9 [2] : vector<8x8x8xf32> to vector<8x8xf32>
    %8 = vector.shape_cast %7 : vector<8x8xf32> to vector<8x8x1xf32>
    %cst_10 = arith.constant 1.000000e+00 : f32
    %9 = vector.broadcast %cst_10 : f32 to vector<8x8x1xf32>
    %10 = arith.addf %8, %9 : vector<8x8x1xf32>
    %11 = math.rsqrt %10 : vector<8x8x1xf32>
    %12 = vector.broadcast %11 : vector<8x8x1xf32> to vector<8x8x16xf32>
    %13 = arith.mulf %4, %12 : vector<8x8x16xf32>
    "tpu.trace_start"() <{level = 10 : i32, message = "gnm,gmc->gnc"}> : () -> ()
    %cst_11 = arith.constant dense<0.000000e+00> : vector<8x8x16xf32>
    %14 = tpu.matmul %6, %13, %cst_11 {dimension_numbers = #tpu.dot_dimension_numbers<[2], [1], [1], [2], [0, 0, 0, 1, 1, 2], [0], [0]>} : vector<8x8x8xf32>, vector<8x8x16xf32>, vector<8x8x16xf32> -> vector<8x8x16xf32>
    "tpu.trace_stop"() : () -> ()
    %15 = arith.addf %14, %13 : vector<8x8x16xf32>
    %16 = vector.broadcast %11 : vector<8x8x1xf32> to vector<8x8x16xf32>
    %17 = arith.mulf %16, %15 : vector<8x8x16xf32>
    %c0_12 = arith.constant 0 : index
    %c0_13 = arith.constant 0 : index
    %18 = vector.load %arg4[%c0_12, %c0_13] : memref<1x16xf32, #tpu.memory_space<vmem>>, vector<1x16xf32>
    %19 = vector.shape_cast %18 : vector<1x16xf32> to vector<1x1x16xf32>
    %20 = vector.broadcast %19 : vector<1x1x16xf32> to vector<8x8x16xf32>
    %21 = arith.addf %17, %20 : vector<8x8x16xf32>
    %22 = vector.shape_cast %21 : vector<8x8x16xf32> to vector<64x16xf32>
    %c0_14 = arith.constant 0 : index
    %c0_15 = arith.constant 0 : index
    %23 = vector.load %arg2[%c0_14, %c0_15] : memref<40x64xf32, #tpu.memory_space<vmem>>, vector<40x64xf32>
    %cst_16 = arith.constant dense<0.000000e+00> : vector<40x16xf32>
    %24 = tpu.matmul %23, %22, %cst_16 {dimension_numbers = #tpu.dot_dimension_numbers<[1], [0], [0], [1], [0, 0, 1, 1], [], []>} : vector<40x64xf32>, vector<64x16xf32>, vector<40x16xf32> -> vector<40x16xf32>
    %cst_17 = arith.constant dense<0.000000e+00> : vector<40x8xf32>
    %25 = tpu.matmul %23, %1, %cst_17 {dimension_numbers = #tpu.dot_dimension_numbers<[1], [0], [0], [1], [0, 0, 1, 1], [], []>} : vector<40x64xf32>, vector<64x8xf32>, vector<40x8xf32> -> vector<40x8xf32>
    %c0_18 = arith.constant 0 : index
    %c0_19 = arith.constant 0 : index
    %26 = vector.load %arg5[%c0_18, %c0_19] : memref<16x128xf32, #tpu.memory_space<vmem>>, vector<16x128xf32>
    %cst_20 = arith.constant dense<0.000000e+00> : vector<40x128xf32>
    %27 = tpu.matmul %24, %26, %cst_20 {dimension_numbers = #tpu.dot_dimension_numbers<[1], [0], [0], [1], [0, 0, 1, 1], [], []>} : vector<40x16xf32>, vector<16x128xf32>, vector<40x128xf32> -> vector<40x128xf32>
    %c0_21 = arith.constant 0 : index
    %c0_22 = arith.constant 0 : index
    %28 = vector.load %arg6[%c0_21, %c0_22] : memref<8x128xf32, #tpu.memory_space<vmem>>, vector<8x128xf32>
    %cst_23 = arith.constant dense<0.000000e+00> : vector<40x128xf32>
    %29 = tpu.matmul %25, %28, %cst_23 {dimension_numbers = #tpu.dot_dimension_numbers<[1], [0], [0], [1], [0, 0, 1, 1], [], []>} : vector<40x8xf32>, vector<8x128xf32>, vector<40x128xf32> -> vector<40x128xf32>
    %30 = arith.addf %27, %29 : vector<40x128xf32>
    %c0_24 = arith.constant 0 : index
    %c0_25 = arith.constant 0 : index
    %31 = vector.load %arg8[%c0_24, %c0_25] : memref<1x128xf32, #tpu.memory_space<vmem>>, vector<1x128xf32>
    %32 = vector.broadcast %31 : vector<1x128xf32> to vector<40x128xf32>
    %33 = arith.addf %30, %32 : vector<40x128xf32>
    %c0_26 = arith.constant 0 : index
    %c0_27 = arith.constant 0 : index
    %34 = vector.load %arg7[%c0_26, %c0_27] : memref<32x128xf32, #tpu.memory_space<vmem>>, vector<32x128xf32>
    %cst_28 = arith.constant 0.000000e+00 : f32
    %35 = vector.broadcast %cst_28 : f32 to vector<10x32xf32>
    %cst_29 = arith.constant 0.000000e+00 : f32
    %36 = vector.broadcast %cst_29 : f32 to vector<10x32xf32>
    %37 = vector.extract_strided_slice %33 {offsets = [0, 0], sizes = [10, 128], strides = [1, 1]} : vector<40x128xf32> to vector<10x128xf32>
    %cst_30 = arith.constant dense<0.000000e+00> : vector<10x128xf32>
    %38 = tpu.matmul %35, %34, %cst_30 {dimension_numbers = #tpu.dot_dimension_numbers<[1], [0], [0], [1], [0, 0, 1, 1], [], []>} : vector<10x32xf32>, vector<32x128xf32>, vector<10x128xf32> -> vector<10x128xf32>
    %39 = arith.addf %37, %38 : vector<10x128xf32>
    %40 = vector.extract_strided_slice %39 {offsets = [0, 0], sizes = [10, 32], strides = [1, 1]} : vector<10x128xf32> to vector<10x32xf32>
    %41 = arith.negf %40 : vector<10x32xf32>
    %42 = math.exp %41 : vector<10x32xf32>
    %cst_31 = arith.constant 1.000000e+00 : f32
    %43 = vector.broadcast %cst_31 : f32 to vector<10x32xf32>
    %44 = arith.addf %43, %42 : vector<10x32xf32>
    %45 = arith.divf %43, %44 : vector<10x32xf32>
    %46 = vector.extract_strided_slice %39 {offsets = [0, 32], sizes = [10, 32], strides = [1, 1]} : vector<10x128xf32> to vector<10x32xf32>
    %47 = arith.negf %46 : vector<10x32xf32>
    %48 = math.exp %47 : vector<10x32xf32>
    %cst_32 = arith.constant 1.000000e+00 : f32
    %49 = vector.broadcast %cst_32 : f32 to vector<10x32xf32>
    %50 = arith.addf %49, %48 : vector<10x32xf32>
    %51 = arith.divf %49, %50 : vector<10x32xf32>
    %52 = vector.extract_strided_slice %39 {offsets = [0, 64], sizes = [10, 32], strides = [1, 1]} : vector<10x128xf32> to vector<10x32xf32>
    %53 = math.tanh %52 : vector<10x32xf32>
    %54 = vector.extract_strided_slice %39 {offsets = [0, 96], sizes = [10, 32], strides = [1, 1]} : vector<10x128xf32> to vector<10x32xf32>
    %55 = arith.negf %54 : vector<10x32xf32>
    %56 = math.exp %55 : vector<10x32xf32>
    %cst_33 = arith.constant 1.000000e+00 : f32
    %57 = vector.broadcast %cst_33 : f32 to vector<10x32xf32>
    %58 = arith.addf %57, %56 : vector<10x32xf32>
    %59 = arith.divf %57, %58 : vector<10x32xf32>
    %60 = arith.mulf %51, %36 : vector<10x32xf32>
    %61 = arith.mulf %45, %53 : vector<10x32xf32>
    %62 = arith.addf %60, %61 : vector<10x32xf32>
    %63 = math.tanh %62 : vector<10x32xf32>
    %64 = arith.mulf %59, %63 : vector<10x32xf32>
    %65 = vector.extract_strided_slice %33 {offsets = [10, 0], sizes = [10, 128], strides = [1, 1]} : vector<40x128xf32> to vector<10x128xf32>
    %cst_34 = arith.constant dense<0.000000e+00> : vector<10x128xf32>
    %66 = tpu.matmul %64, %34, %cst_34 {dimension_numbers = #tpu.dot_dimension_numbers<[1], [0], [0], [1], [0, 0, 1, 1], [], []>} : vector<10x32xf32>, vector<32x128xf32>, vector<10x128xf32> -> vector<10x128xf32>
    %67 = arith.addf %65, %66 : vector<10x128xf32>
    %68 = vector.extract_strided_slice %67 {offsets = [0, 0], sizes = [10, 32], strides = [1, 1]} : vector<10x128xf32> to vector<10x32xf32>
    %69 = arith.negf %68 : vector<10x32xf32>
    %70 = math.exp %69 : vector<10x32xf32>
    %cst_35 = arith.constant 1.000000e+00 : f32
    %71 = vector.broadcast %cst_35 : f32 to vector<10x32xf32>
    %72 = arith.addf %71, %70 : vector<10x32xf32>
    %73 = arith.divf %71, %72 : vector<10x32xf32>
    %74 = vector.extract_strided_slice %67 {offsets = [0, 32], sizes = [10, 32], strides = [1, 1]} : vector<10x128xf32> to vector<10x32xf32>
    %75 = arith.negf %74 : vector<10x32xf32>
    %76 = math.exp %75 : vector<10x32xf32>
    %cst_36 = arith.constant 1.000000e+00 : f32
    %77 = vector.broadcast %cst_36 : f32 to vector<10x32xf32>
    %78 = arith.addf %77, %76 : vector<10x32xf32>
    %79 = arith.divf %77, %78 : vector<10x32xf32>
    %80 = vector.extract_strided_slice %67 {offsets = [0, 64], sizes = [10, 32], strides = [1, 1]} : vector<10x128xf32> to vector<10x32xf32>
    %81 = math.tanh %80 : vector<10x32xf32>
    %82 = vector.extract_strided_slice %67 {offsets = [0, 96], sizes = [10, 32], strides = [1, 1]} : vector<10x128xf32> to vector<10x32xf32>
    %83 = arith.negf %82 : vector<10x32xf32>
    %84 = math.exp %83 : vector<10x32xf32>
    %cst_37 = arith.constant 1.000000e+00 : f32
    %85 = vector.broadcast %cst_37 : f32 to vector<10x32xf32>
    %86 = arith.addf %85, %84 : vector<10x32xf32>
    %87 = arith.divf %85, %86 : vector<10x32xf32>
    %88 = arith.mulf %79, %62 : vector<10x32xf32>
    %89 = arith.mulf %73, %81 : vector<10x32xf32>
    %90 = arith.addf %88, %89 : vector<10x32xf32>
    %91 = math.tanh %90 : vector<10x32xf32>
    %92 = arith.mulf %87, %91 : vector<10x32xf32>
    %93 = vector.extract_strided_slice %33 {offsets = [20, 0], sizes = [10, 128], strides = [1, 1]} : vector<40x128xf32> to vector<10x128xf32>
    %cst_38 = arith.constant dense<0.000000e+00> : vector<10x128xf32>
    %94 = tpu.matmul %92, %34, %cst_38 {dimension_numbers = #tpu.dot_dimension_numbers<[1], [0], [0], [1], [0, 0, 1, 1], [], []>} : vector<10x32xf32>, vector<32x128xf32>, vector<10x128xf32> -> vector<10x128xf32>
    %95 = arith.addf %93, %94 : vector<10x128xf32>
    %96 = vector.extract_strided_slice %95 {offsets = [0, 0], sizes = [10, 32], strides = [1, 1]} : vector<10x128xf32> to vector<10x32xf32>
    %97 = arith.negf %96 : vector<10x32xf32>
    %98 = math.exp %97 : vector<10x32xf32>
    %cst_39 = arith.constant 1.000000e+00 : f32
    %99 = vector.broadcast %cst_39 : f32 to vector<10x32xf32>
    %100 = arith.addf %99, %98 : vector<10x32xf32>
    %101 = arith.divf %99, %100 : vector<10x32xf32>
    %102 = vector.extract_strided_slice %95 {offsets = [0, 32], sizes = [10, 32], strides = [1, 1]} : vector<10x128xf32> to vector<10x32xf32>
    %103 = arith.negf %102 : vector<10x32xf32>
    %104 = math.exp %103 : vector<10x32xf32>
    %cst_40 = arith.constant 1.000000e+00 : f32
    %105 = vector.broadcast %cst_40 : f32 to vector<10x32xf32>
    %106 = arith.addf %105, %104 : vector<10x32xf32>
    %107 = arith.divf %105, %106 : vector<10x32xf32>
    %108 = vector.extract_strided_slice %95 {offsets = [0, 64], sizes = [10, 32], strides = [1, 1]} : vector<10x128xf32> to vector<10x32xf32>
    %109 = math.tanh %108 : vector<10x32xf32>
    %110 = vector.extract_strided_slice %95 {offsets = [0, 96], sizes = [10, 32], strides = [1, 1]} : vector<10x128xf32> to vector<10x32xf32>
    %111 = arith.negf %110 : vector<10x32xf32>
    %112 = math.exp %111 : vector<10x32xf32>
    %cst_41 = arith.constant 1.000000e+00 : f32
    %113 = vector.broadcast %cst_41 : f32 to vector<10x32xf32>
    %114 = arith.addf %113, %112 : vector<10x32xf32>
    %115 = arith.divf %113, %114 : vector<10x32xf32>
    %116 = arith.mulf %107, %90 : vector<10x32xf32>
    %117 = arith.mulf %101, %109 : vector<10x32xf32>
    %118 = arith.addf %116, %117 : vector<10x32xf32>
    %119 = math.tanh %118 : vector<10x32xf32>
    %120 = arith.mulf %115, %119 : vector<10x32xf32>
    %121 = vector.extract_strided_slice %33 {offsets = [30, 0], sizes = [10, 128], strides = [1, 1]} : vector<40x128xf32> to vector<10x128xf32>
    %cst_42 = arith.constant dense<0.000000e+00> : vector<10x128xf32>
    %122 = tpu.matmul %120, %34, %cst_42 {dimension_numbers = #tpu.dot_dimension_numbers<[1], [0], [0], [1], [0, 0, 1, 1], [], []>} : vector<10x32xf32>, vector<32x128xf32>, vector<10x128xf32> -> vector<10x128xf32>
    %123 = arith.addf %121, %122 : vector<10x128xf32>
    %124 = vector.extract_strided_slice %123 {offsets = [0, 0], sizes = [10, 32], strides = [1, 1]} : vector<10x128xf32> to vector<10x32xf32>
    %125 = arith.negf %124 : vector<10x32xf32>
    %126 = math.exp %125 : vector<10x32xf32>
    %cst_43 = arith.constant 1.000000e+00 : f32
    %127 = vector.broadcast %cst_43 : f32 to vector<10x32xf32>
    %128 = arith.addf %127, %126 : vector<10x32xf32>
    %129 = arith.divf %127, %128 : vector<10x32xf32>
    %130 = vector.extract_strided_slice %123 {offsets = [0, 32], sizes = [10, 32], strides = [1, 1]} : vector<10x128xf32> to vector<10x32xf32>
    %131 = arith.negf %130 : vector<10x32xf32>
    %132 = math.exp %131 : vector<10x32xf32>
    %cst_44 = arith.constant 1.000000e+00 : f32
    %133 = vector.broadcast %cst_44 : f32 to vector<10x32xf32>
    %134 = arith.addf %133, %132 : vector<10x32xf32>
    %135 = arith.divf %133, %134 : vector<10x32xf32>
    %136 = vector.extract_strided_slice %123 {offsets = [0, 64], sizes = [10, 32], strides = [1, 1]} : vector<10x128xf32> to vector<10x32xf32>
    %137 = math.tanh %136 : vector<10x32xf32>
    %138 = vector.extract_strided_slice %123 {offsets = [0, 96], sizes = [10, 32], strides = [1, 1]} : vector<10x128xf32> to vector<10x32xf32>
    %139 = arith.negf %138 : vector<10x32xf32>
    %140 = math.exp %139 : vector<10x32xf32>
    %cst_45 = arith.constant 1.000000e+00 : f32
    %141 = vector.broadcast %cst_45 : f32 to vector<10x32xf32>
    %142 = arith.addf %141, %140 : vector<10x32xf32>
    %143 = arith.divf %141, %142 : vector<10x32xf32>
    %144 = arith.mulf %135, %118 : vector<10x32xf32>
    %145 = arith.mulf %129, %137 : vector<10x32xf32>
    %146 = arith.addf %144, %145 : vector<10x32xf32>
    %147 = math.tanh %146 : vector<10x32xf32>
    %148 = arith.mulf %143, %147 : vector<10x32xf32>
    %149 = tpu.concatenate %64, %92, %120, %148 in 0 : vector<10x32xf32>, vector<10x32xf32>, vector<10x32xf32>, vector<10x32xf32> -> vector<40x32xf32>
    %c0_46 = arith.constant 0 : index
    %c0_47 = arith.constant 0 : index
    %150 = vector.load %arg9[%c0_46, %c0_47] : memref<32x8xf32, #tpu.memory_space<vmem>>, vector<32x8xf32>
    %cst_48 = arith.constant dense<0.000000e+00> : vector<40x8xf32>
    %151 = tpu.matmul %149, %150, %cst_48 {dimension_numbers = #tpu.dot_dimension_numbers<[1], [0], [0], [1], [0, 0, 1, 1], [], []>} : vector<40x32xf32>, vector<32x8xf32>, vector<40x8xf32> -> vector<40x8xf32>
    %c0_49 = arith.constant 0 : index
    %c0_50 = arith.constant 0 : index
    %152 = vector.load %arg10[%c0_49, %c0_50] : memref<1x8xf32, #tpu.memory_space<vmem>>, vector<1x8xf32>
    %153 = vector.broadcast %152 : vector<1x8xf32> to vector<40x8xf32>
    %154 = arith.addf %151, %153 : vector<40x8xf32>
    %cst_51 = arith.constant dense<0xFF800000> : vector<40xf32>
    %155 = vector.multi_reduction <maximumf>, %154, %cst_51 [1] : vector<40x8xf32> to vector<40xf32>
    %156 = vector.shape_cast %155 : vector<40xf32> to vector<40x1xf32>
    %157 = vector.broadcast %156 : vector<40x1xf32> to vector<40x8xf32>
    %158 = arith.subf %154, %157 : vector<40x8xf32>
    %159 = math.exp %158 : vector<40x8xf32>
    %cst_52 = arith.constant dense<0.000000e+00> : vector<40xf32>
    %160 = vector.multi_reduction <add>, %159, %cst_52 [1] : vector<40x8xf32> to vector<40xf32>
    %161 = vector.shape_cast %160 : vector<40xf32> to vector<40x1xf32>
    %162 = math.log %161 : vector<40x1xf32>
    %163 = vector.broadcast %162 : vector<40x1xf32> to vector<40x8xf32>
    %164 = arith.subf %158, %163 : vector<40x8xf32>
    %c0_53 = arith.constant 0 : index
    %c0_54 = arith.constant 0 : index
    %165 = vector.load %arg11[%c0_53, %c0_54] : memref<40x8xf32, #tpu.memory_space<vmem>>, vector<40x8xf32>
    tpu.vector_store %arg11[%c0_53, %c0_54], %164 {strides = array<i32>} : memref<40x8xf32, #tpu.memory_space<vmem>>, vector<40x8xf32>,
    return
  }
}

</mosaic_0001>

<llo_original>
// kernel: our_model_forward.1
$region0: #{our_model_forward.1}
  #allocation0 [shape = 'u32[]', space=smem, size = 0x4, offset = 0x4, fixed_abs, tag = 'smem constant byte address 0x4 - core index']
  #allocation1 [shape = 'u32[144,128]{1,0:T(1,128)}', space=vmem, size = 0x12000, scoped, tag = 'internal scratch']
  %s0 = inlined_call_operand.vmem [shape: f32[2,4,8,8], index: 0, kind: input, shape index: {}]
  %s1 = inlined_call_operand.hbm [shape: f32[2,4,8,8], index: 1, kind: input, shape index: {}]
  %s2 = inlined_call_operand.vmem [shape: f32[40,64], index: 2, kind: input, shape index: {}]
  %s3 = inlined_call_operand.hbm [shape: f32[8,16], index: 3, kind: input, shape index: {}]
  %s4 = inlined_call_operand.vmem [shape: f32[1,16], index: 4, kind: input, shape index: {}]
  %s5 = inlined_call_operand.vmem [shape: f32[16,128], index: 5, kind: input, shape index: {}]
  %s6 = inlined_call_operand.vmem [shape: f32[8,128], index: 6, kind: input, shape index: {}]
  %s7 = inlined_call_operand.vmem [shape: f32[32,128], index: 7, kind: input, shape index: {}]
  %s8 = inlined_call_operand.vmem [shape: f32[1,128], index: 8, kind: input, shape index: {}]
  %s9 = inlined_call_operand.vmem [shape: f32[32,8], index: 9, kind: input, shape index: {}]
  %s10 = inlined_call_operand.hbm [shape: f32[1,8], index: 10, kind: input, shape index: {}]
  %s11 = inlined_call_operand.vmem [shape: f32[40,8], index: 11, kind: output, shape index: {}]
  %s12 = sld [smem:[#allocation0]]
  $region66: #{our_model_forward.1} parent=0
    _
  %s14 = ssub.s32 1, %s12
  %s15 = scalar_select 0, %s14, %s12
  $region1: #{our_model_forward.1} parent=0
    #allocation2 [shape = 'u8[32768]{0}', space=vmem, size = 0x8000, scoped, tag = 'input window, operand 1, single buffered']
    #allocation3 [shape = 's32[1]{0}', space=sflag, size = 0x4, scoped, tag = 'scoped memory for our_model_forward.1']
    #allocation4 [shape = 'u8[4096]{0}', space=vmem, size = 0x1000, scoped, tag = 'input window, operand 3, single buffered']
    #allocation5 [shape = 's32[1]{0}', space=sflag, size = 0x4, scoped, tag = 'scoped memory for our_model_forward.1']
    #allocation6 [shape = 'u8[512]{0}', space=vmem, size = 0x400, scoped, tag = 'input window, operand 10, single buffered']
    %16 = vsyncpa [#allocation3], 0
    %17 = vsyncpa [#allocation5], 0
    // Predicated region
    $region2: #{our_model_forward.1} parent=1 // pred_check
      _
    $region3: #{our_model_forward.1} parent=1 // pred_check_branch
      %19 = sbr.rel (0) target = $region5
    $region4: #{our_model_forward.1} parent=1 // pred_region
      _
    $region5: #{our_model_forward.1} parent=1 // pred_fallthru
      _
    // Predicated region
    $region6: #{our_model_forward.1} parent=1 // pred_check
      _
    $region7: #{our_model_forward.1} parent=1 // pred_check_branch
      %21 = sbr.rel (0) target = $region9
    $region8: #{our_model_forward.1} parent=1 // pred_region
      %s23 = ssub.s32 1024, 1024
      %24 = vsyncadd [#allocation3], %s23
      %s25 = sshll.u32 [#allocation2], 4
      %s26 = int_to_ptr.vmem [resolvable:$true] %s25
      %31 = dma.hbm_to_vmem [thread:$0]  %s1, 1024, %s26, [#allocation3], 128, 128, 8
    $region9: #{our_model_forward.1} parent=1 // pred_fallthru
      _
    // Predicated region
    $region10: #{our_model_forward.1} parent=1 // pred_check
      _
    $region11: #{our_model_forward.1} parent=1 // pred_check_branch
      %33 = sbr.rel (0) target = $region13
    $region12: #{our_model_forward.1} parent=1 // pred_region
      _
    $region13: #{our_model_forward.1} parent=1 // pred_fallthru
      _
    // Predicated region
    $region14: #{our_model_forward.1} parent=1 // pred_check
      _
    $region15: #{our_model_forward.1} parent=1 // pred_check_branch
      %35 = sbr.rel (0) target = $region17
    $region16: #{our_model_forward.1} parent=1 // pred_region
      %s37 = ssub.s32 128, 128
      %38 = vsyncadd [#allocation5], %s37
      %s40 = sshll.u32 [#allocation4], 4
      %s41 = int_to_ptr.vmem [resolvable:$true] %s40
      %43 = dma.hbm_to_vmem [thread:$0]  %s3, 128, %s41, [#allocation5]
    $region17: #{our_model_forward.1} parent=1 // pred_fallthru
      _
    // Predicated region
    $region18: #{our_model_forward.1} parent=1 // pred_check
      _
    $region19: #{our_model_forward.1} parent=1 // pred_check_branch
      %45 = sbr.rel (0) target = $region21
    $region20: #{our_model_forward.1} parent=1 // pred_region
      _
    $region21: #{our_model_forward.1} parent=1 // pred_fallthru
      _
    // Predicated region
    $region22: #{our_model_forward.1} parent=1 // pred_check
      _
    $region23: #{our_model_forward.1} parent=1 // pred_check_branch
      %47 = sbr.rel (0) target = $region25
    $region24: #{our_model_forward.1} parent=1 // pred_region
      _
    $region25: #{our_model_forward.1} parent=1 // pred_fallthru
      _
    // Predicated region
    $region26: #{our_model_forward.1} parent=1 // pred_check
      _
    $region27: #{our_model_forward.1} parent=1 // pred_check_branch
      %49 = sbr.rel (0) target = $region29
    $region28: #{our_model_forward.1} parent=1 // pred_region
      _
    $region29: #{our_model_forward.1} parent=1 // pred_fallthru
      _
    // Predicated region
    $region30: #{our_model_forward.1} parent=1 // pred_check
      _
    $region31: #{our_model_forward.1} parent=1 // pred_check_branch
      %51 = sbr.rel (0) target = $region33
    $region32: #{our_model_forward.1} parent=1 // pred_region
      _
    $region33: #{our_model_forward.1} parent=1 // pred_fallthru
      _
    // Predicated region
    $region34: #{our_model_forward.1} parent=1 // pred_check
      _
    $region35: #{our_model_forward.1} parent=1 // pred_check_branch
      %53 = sbr.rel (0) target = $region37
    $region36: #{our_model_forward.1} parent=1 // pred_region
      _
    $region37: #{our_model_forward.1} parent=1 // pred_fallthru
      _
    // Predicated region
    $region38: #{our_model_forward.1} parent=1 // pred_check
      _
    $region39: #{our_model_forward.1} parent=1 // pred_check_branch
      %55 = sbr.rel (0) target = $region41
    $region40: #{our_model_forward.1} parent=1 // pred_region
      _
    $region41: #{our_model_forward.1} parent=1 // pred_fallthru
      _
    // Predicated region
    $region42: #{our_model_forward.1} parent=1 // pred_check
      _
    $region43: #{our_model_forward.1} parent=1 // pred_check_branch
      %57 = sbr.rel (0) target = $region45
    $region44: #{our_model_forward.1} parent=1 // pred_region
      %s59 = ssub.s32 16, 16
      %60 = vsyncadd [#allocation5], %s59
      %s62 = sshll.u32 [#allocation6], 4
      %s63 = int_to_ptr.vmem [resolvable:$true] %s62
      %65 = dma.hbm_to_vmem [thread:$0]  %s10, 16, %s63, [#allocation5]
    $region45: #{our_model_forward.1} parent=1 // pred_fallthru
      _
    // Predicated region
    $region46: #{our_model_forward.1} parent=1 // pred_check
      _
    $region47: #{our_model_forward.1} parent=1 // pred_check_branch
      %67 = sbr.rel (0) target = $region49
    $region48: #{our_model_forward.1} parent=1 // pred_region
      %68 = dma.done [#allocation3], 1024
    $region49: #{our_model_forward.1} parent=1 // pred_fallthru
      _
    // Predicated region
    $region50: #{our_model_forward.1} parent=1 // pred_check
      _
    $region51: #{our_model_forward.1} parent=1 // pred_check_branch
      %70 = sbr.rel (0) target = $region53
    $region52: #{our_model_forward.1} parent=1 // pred_region
      %71 = dma.done [#allocation5], 128
    $region53: #{our_model_forward.1} parent=1 // pred_fallthru
      _
    // Predicated region
    $region54: #{our_model_forward.1} parent=1 // pred_check
      _
    $region55: #{our_model_forward.1} parent=1 // pred_check_branch
      %73 = sbr.rel (0) target = $region57
    $region56: #{our_model_forward.1} parent=1 // pred_region
      %74 = dma.done [#allocation5], 16
    $region57: #{our_model_forward.1} parent=1 // pred_fallthru
      _
    %v75 = vld [vmem:[%s0] sm:$0xff]
    %v76 = vld [vmem:[%s0 + $0x8] sm:$0xff]
    %v77 = vld [vmem:[%s0 + $0x10] sm:$0xff]
    %v78 = vld [vmem:[%s0 + $0x18] sm:$0xff]
    %v79 = vld [vmem:[%s0 + $0x20] sm:$0xff]
    %v80 = vld [vmem:[%s0 + $0x28] sm:$0xff]
    %v81 = vld [vmem:[%s0 + $0x30] sm:$0xff]
    %v82 = vld [vmem:[%s0 + $0x38] sm:$0xff]
    %v83 = vld [vmem:[#allocation4] sm:$0xff]
    %vm84 = vcmask 64512
    %v86 = vsel %vm84, %v75, 0
    %v89 = vsel %vm84, %v76, 0
    %v92 = vsel %vm84, %v77, 0
    %v95 = vsel %vm84, %v78, 0
    %v98 = vsel %vm84, %v79, 0
    %v101 = vsel %vm84, %v80, 0
    %v104 = vsel %vm84, %v81, 0
    %v107 = vsel %vm84, %v82, 0
    %109 = vmatprep.subr.mxu0 0.0
    %110 = vmatpush1.msra.mxu0 %v83
    %111 = vmatprep.subr.mxu0 0.0
    %112 = vmatpush1.msra.mxu0 0.0
    %113 = vmatprep.subr.mxu0 0.0
    %114 = vmatpush1.msra.mxu0 0.0
    %115 = vmatprep.subr.mxu0 0.0
    %116 = vmatpush1.msra.mxu0 0.0
    %117 = vmatprep.subr.mxu0 0.0
    %118 = vmatpush1.msra.mxu0 0.0
    %119 = vmatprep.subr.mxu0 0.0
    %120 = vmatpush1.msra.mxu0 0.0
    %121 = vmatprep.subr.mxu0 0.0
    %122 = vmatpush1.msra.mxu0 0.0
    %123 = vmatprep.subr.mxu0 0.0
    %124 = vmatpush1.msra.mxu0 0.0
    %125 = vmatprep.subr.mxu0 0.0
    %126 = vmatpush1.msra.mxu0 0.0
    %127 = vmatprep.subr.mxu0 0.0
    %128 = vmatpush1.msra.mxu0 0.0
    %129 = vmatprep.subr.mxu0 0.0
    %130 = vmatpush1.msra.mxu0 0.0
    %131 = vmatprep.subr.mxu0 0.0
    %132 = vmatpush1.msra.mxu0 0.0
    %133 = vmatprep.subr.mxu0 0.0
    %134 = vmatpush1.msra.mxu0 0.0
    %135 = vmatprep.subr.mxu0 0.0
    %136 = vmatpush1.msra.mxu0 0.0
    %137 = vmatprep.subr.mxu0 0.0
    %138 = vmatpush1.msra.mxu0 0.0
    %139 = vmatprep.subr.mxu0 0.0
    %140 = vmatpush1.msra.mxu0 0.0
    %141 = vmatprep.subr.mxu0 0.0
    %142 = vmatpush1.msra.mxu0 0.0
    %143 = vmatprep.subr.mxu0 0.0
    %144 = vmatpush1.msra.mxu0 0.0
    %145 = vmatprep.subr.mxu0 0.0
    %146 = vmatpush1.msra.mxu0 0.0
    %147 = vmatprep.subr.mxu0 0.0
    %148 = vmatpush1.msra.mxu0 0.0
    %149 = vmatprep.subr.mxu0 0.0
    %150 = vmatpush1.msra.mxu0 0.0
    %151 = vmatprep.subr.mxu0 0.0
    %152 = vmatpush1.msra.mxu0 0.0
    %153 = vmatprep.subr.mxu0 0.0
    %154 = vmatpush1.msra.mxu0 0.0
    %155 = vmatprep.subr.mxu0 0.0
    %156 = vmatpush1.msra.mxu0 0.0
    %157 = vmatprep.subr.mxu0 0.0
    %158 = vmatpush1.msra.mxu0 0.0
    %159 = vmatprep.subr.mxu0 0.0
    %160 = vmatpush1.msra.mxu0 0.0
    %161 = vmatprep.subr.mxu0 0.0
    %162 = vmatpush1.msra.mxu0 0.0
    %163 = vmatprep.subr.mxu0 0.0
    %164 = vmatpush1.msra.mxu0 0.0
    %165 = vmatprep.subr.mxu0 0.0
    %166 = vmatpush1.msra.mxu0 0.0
    %167 = vmatprep.subr.mxu0 0.0
    %168 = vmatpush1.msra.mxu0 0.0
    %169 = vmatprep.subr.mxu0 0.0
    %170 = vmatpush1.msra.mxu0 0.0
    %171 = vmatprep.subr.mxu0 0.0
    %172 = vmatpush1.msra.mxu0 0.0
    %173 = vmatprep.mubr.f32.mxu0 0.0
    %174 = vmatmul.mubr.f32.gmra.mrb[0].mxu0 %v86
    %v175 = vpop.f32.mrb[0].mxu0
    %v176 = vadd.f32 0.0, %v175
    %v177 = vpop.f32.mrb[0].mxu0
    %178 = vmatprep.mubr.f32.mxu0 0.0
    %179 = vmatmul.mubr.f32.gmra.mrb[0].mxu0 %v89
    %v180 = vpop.f32.mrb[0].mxu0
    %v181 = vadd.f32 0.0, %v180
    %v182 = vpop.f32.mrb[0].mxu0
    %183 = vmatprep.mubr.f32.mxu0 0.0
    %184 = vmatmul.mubr.f32.gmra.mrb[0].mxu0 %v92
    %v185 = vpop.f32.mrb[0].mxu0
    %v186 = vadd.f32 0.0, %v185
    %v187 = vpop.f32.mrb[0].mxu0
    %188 = vmatprep.mubr.f32.mxu0 0.0
    %189 = vmatmul.mubr.f32.gmra.mrb[0].mxu0 %v95
    %v190 = vpop.f32.mrb[0].mxu0
    %v191 = vadd.f32 0.0, %v190
    %v192 = vpop.f32.mrb[0].mxu0
    %193 = vmatprep.mubr.f32.mxu0 0.0
    %194 = vmatmul.mubr.f32.gmra.mrb[0].mxu0 %v98
    %v195 = vpop.f32.mrb[0].mxu0
    %v196 = vadd.f32 0.0, %v195
    %v197 = vpop.f32.mrb[0].mxu0
    %198 = vmatprep.mubr.f32.mxu0 0.0
    %199 = vmatmul.mubr.f32.gmra.mrb[0].mxu0 %v101
    %v200 = vpop.f32.mrb[0].mxu0
    %v201 = vadd.f32 0.0, %v200
    %v202 = vpop.f32.mrb[0].mxu0
    %203 = vmatprep.mubr.f32.mxu0 0.0
    %204 = vmatmul.mubr.f32.gmra.mrb[0].mxu0 %v104
    %v205 = vpop.f32.mrb[0].mxu0
    %v206 = vadd.f32 0.0, %v205
    %v207 = vpop.f32.mrb[0].mxu0
    %208 = vmatprep.mubr.f32.mxu0 0.0
    %209 = vmatmul.mubr.f32.gmra.mrb[0].mxu0 %v107
    %v210 = vpop.f32.mrb[0].mxu0
    %v211 = vadd.f32 0.0, %v210
    %v212 = vpop.f32.mrb[0].mxu0
    %213 = vdwg.mxu0
    %v214 = vld [vmem:[#allocation2] sm:$0xff]
    %v215 = vld [vmem:[#allocation2 + $0x8] sm:$0xff]
    %v216 = vld [vmem:[#allocation2 + $0x10] sm:$0xff]
    %v217 = vld [vmem:[#allocation2 + $0x18] sm:$0xff]
    %v218 = vld [vmem:[#allocation2 + $0x20] sm:$0xff]
    %v219 = vld [vmem:[#allocation2 + $0x28] sm:$0xff]
    %v220 = vld [vmem:[#allocation2 + $0x30] sm:$0xff]
    %v221 = vld [vmem:[#allocation2 + $0x38] sm:$0xff]
    %v222 = vsel %vm84, %v214, 0.0
    %223 = vadd.xlane.f32.xlu0 %v222
    %v224 = vpop.xlane.xlu0 %223
    %v225 = vsel %vm84, %v215, 0.0
    %226 = vadd.xlane.f32.xlu0 %v225
    %v227 = vpop.xlane.xlu0 %226
    %v228 = vsel %vm84, %v216, 0.0
    %229 = vadd.xlane.f32.xlu0 %v228
    %v230 = vpop.xlane.xlu0 %229
    %v231 = vsel %vm84, %v217, 0.0
    %232 = vadd.xlane.f32.xlu0 %v231
    %v233 = vpop.xlane.xlu0 %232
    %v234 = vsel %vm84, %v218, 0.0
    %235 = vadd.xlane.f32.xlu0 %v234
    %v236 = vpop.xlane.xlu0 %235
    %v237 = vsel %vm84, %v219, 0.0
    %238 = vadd.xlane.f32.xlu0 %v237
    %v239 = vpop.xlane.xlu0 %238
    %v240 = vsel %vm84, %v220, 0.0
    %241 = vadd.xlane.f32.xlu0 %v240
    %v242 = vpop.xlane.xlu0 %241
    %v243 = vsel %vm84, %v221, 0.0
    %244 = vadd.xlane.f32.xlu0 %v243
    %v245 = vpop.xlane.xlu0 %244
    %v246 = vadd.f32 %v224, 1.0
    %v247 = vadd.f32 %v227, 1.0
    %v248 = vadd.f32 %v230, 1.0
    %v249 = vadd.f32 %v233, 1.0
    %v250 = vadd.f32 %v236, 1.0
    %v251 = vadd.f32 %v239, 1.0
    %v252 = vadd.f32 %v242, 1.0
    %v253 = vadd.f32 %v245, 1.0
    %v254 = vrsqrt.pop %v246
    %v255 = vrsqrt.pop %v247
    %v256 = vrsqrt.pop %v248
    %v257 = vrsqrt.pop %v249
    %v258 = vrsqrt.pop %v250
    %v259 = vrsqrt.pop %v251
    %v260 = vrsqrt.pop %v252
    %v261 = vrsqrt.pop %v253
    %v262 = vmul.f32 %v176, %v254
    %v263 = vmul.f32 %v181, %v255
    %v264 = vmul.f32 %v186, %v256
    %v265 = vmul.f32 %v191, %v257
    %v266 = vmul.f32 %v196, %v258
    %v267 = vmul.f32 %v201, %v259
    %v268 = vmul.f32 %v206, %v260
    %v269 = vmul.f32 %v211, %v261
    %v271 = vsel %vm84, %v214, 0
    %273 = vmatprep.subr.mxu0 0.0
    %274 = vmatpush1.msra.mxu0 %v262
    %275 = vmatprep.subr.mxu0 0.0
    %276 = vmatpush1.msra.mxu0 0.0
    %277 = vmatprep.subr.mxu0 0.0
    %278 = vmatpush1.msra.mxu0 0.0
    %279 = vmatprep.subr.mxu0 0.0
    %280 = vmatpush1.msra.mxu0 0.0
    %281 = vmatprep.subr.mxu0 0.0
    %282 = vmatpush1.msra.mxu0 0.0
    %283 = vmatprep.subr.mxu0 0.0
    %284 = vmatpush1.msra.mxu0 0.0
    %285 = vmatprep.subr.mxu0 0.0
    %286 = vmatpush1.msra.mxu0 0.0
    %287 = vmatprep.subr.mxu0 0.0
    %288 = vmatpush1.msra.mxu0 0.0
    %289 = vmatprep.subr.mxu0 0.0
    %290 = vmatpush1.msra.mxu0 0.0
    %291 = vmatprep.subr.mxu0 0.0
    %292 = vmatpush1.msra.mxu0 0.0
    %293 = vmatprep.subr.mxu0 0.0
    %294 = vmatpush1.msra.mxu0 0.0
    %295 = vmatprep.subr.mxu0 0.0
    %296 = vmatpush1.msra.mxu0 0.0
    %297 = vmatprep.subr.mxu0 0.0
    %298 = vmatpush1.msra.mxu0 0.0
    %299 = vmatprep.subr.mxu0 0.0
    %300 = vmatpush1.msra.mxu0 0.0
    %301 = vmatprep.subr.mxu0 0.0
    %302 = vmatpush1.msra.mxu0 0.0
    %303 = vmatprep.subr.mxu0 0.0
    %304 = vmatpush1.msra.mxu0 0.0
    %305 = vmatprep.subr.mxu0 0.0
    %306 = vmatpush1.msra.mxu0 0.0
    %307 = vmatprep.subr.mxu0 0.0
    %308 = vmatpush1.msra.mxu0 0.0
    %309 = vmatprep.subr.mxu0 0.0
    %310 = vmatpush1.msra.mxu0 0.0
    %311 = vmatprep.subr.mxu0 0.0
    %312 = vmatpush1.msra.mxu0 0.0
    %313 = vmatprep.subr.mxu0 0.0
    %314 = vmatpush1.msra.mxu0 0.0
    %315 = vmatprep.subr.mxu0 0.0
    %316 = vmatpush1.msra.mxu0 0.0
    %317 = vmatprep.subr.mxu0 0.0
    %318 = vmatpush1.msra.mxu0 0.0
    %319 = vmatprep.subr.mxu0 0.0
    %320 = vmatpush1.msra.mxu0 0.0
    %321 = vmatprep.subr.mxu0 0.0
    %322 = vmatpush1.msra.mxu0 0.0
    %323 = vmatprep.subr.mxu0 0.0
    %324 = vmatpush1.msra.mxu0 0.0
    %325 = vmatprep.subr.mxu0 0.0
    %326 = vmatpush1.msra.mxu0 0.0
    %327 = vmatprep.subr.mxu0 0.0
    %328 = vmatpush1.msra.mxu0 0.0
    %329 = vmatprep.subr.mxu0 0.0
    %330 = vmatpush1.msra.mxu0 0.0
    %331 = vmatprep.subr.mxu0 0.0
    %332 = vmatpush1.msra.mxu0 0.0
    %333 = vmatprep.subr.mxu0 0.0
    %334 = vmatpush1.msra.mxu0 0.0
    %335 = vmatprep.subr.mxu0 0.0
    %336 = vmatpush1.msra.mxu0 0.0
    %337 = vmatprep.mubr.f32.mxu0 0.0
    %338 = vmatmul.mubr.f32.gmra.mrb[0].mxu0 %v271
    %v339 = vpop.f32.mrb[0].mxu0
    %v340 = vadd.f32 %v262, %v339
    %v341 = vpop.f32.mrb[0].mxu0
    %342 = vdwg.mxu0
    %v344 = vsel %vm84, %v215, 0
    %346 = vmatprep.subr.mxu0 0.0
    %347 = vmatpush1.msra.mxu0 %v263
    %348 = vmatprep.subr.mxu0 0.0
    %349 = vmatpush1.msra.mxu0 0.0
    %350 = vmatprep.subr.mxu0 0.0
    %351 = vmatpush1.msra.mxu0 0.0
    %352 = vmatprep.subr.mxu0 0.0
    %353 = vmatpush1.msra.mxu0 0.0
    %354 = vmatprep.subr.mxu0 0.0
    %355 = vmatpush1.msra.mxu0 0.0
    %356 = vmatprep.subr.mxu0 0.0
    %357 = vmatpush1.msra.mxu0 0.0
    %358 = vmatprep.subr.mxu0 0.0
    %359 = vmatpush1.msra.mxu0 0.0
    %360 = vmatprep.subr.mxu0 0.0
    %361 = vmatpush1.msra.mxu0 0.0
    %362 = vmatprep.subr.mxu0 0.0
    %363 = vmatpush1.msra.mxu0 0.0
    %364 = vmatprep.subr.mxu0 0.0
    %365 = vmatpush1.msra.mxu0 0.0
    %366 = vmatprep.subr.mxu0 0.0
    %367 = vmatpush1.msra.mxu0 0.0
    %368 = vmatprep.subr.mxu0 0.0
    %369 = vmatpush1.msra.mxu0 0.0
    %370 = vmatprep.subr.mxu0 0.0
    %371 = vmatpush1.msra.mxu0 0.0
    %372 = vmatprep.subr.mxu0 0.0
    %373 = vmatpush1.msra.mxu0 0.0
    %374 = vmatprep.subr.mxu0 0.0
    %375 = vmatpush1.msra.mxu0 0.0
    %376 = vmatprep.subr.mxu0 0.0
    %377 = vmatpush1.msra.mxu0 0.0
    %378 = vmatprep.subr.mxu0 0.0
    %379 = vmatpush1.msra.mxu0 0.0
    %380 = vmatprep.subr.mxu0 0.0
    %381 = vmatpush1.msra.mxu0 0.0
    %382 = vmatprep.subr.mxu0 0.0
    %383 = vmatpush1.msra.mxu0 0.0
    %384 = vmatprep.subr.mxu0 0.0
    %385 = vmatpush1.msra.mxu0 0.0
    %386 = vmatprep.subr.mxu0 0.0
    %387 = vmatpush1.msra.mxu0 0.0
    %388 = vmatprep.subr.mxu0 0.0
    %389 = vmatpush1.msra.mxu0 0.0
    %390 = vmatprep.subr.mxu0 0.0
    %391 = vmatpush1.msra.mxu0 0.0
    %392 = vmatprep.subr.mxu0 0.0
    %393 = vmatpush1.msra.mxu0 0.0
    %394 = vmatprep.subr.mxu0 0.0
    %395 = vmatpush1.msra.mxu0 0.0
    %396 = vmatprep.subr.mxu0 0.0
    %397 = vmatpush1.msra.mxu0 0.0
    %398 = vmatprep.subr.mxu0 0.0
    %399 = vmatpush1.msra.mxu0 0.0
    %400 = vmatprep.subr.mxu0 0.0
    %401 = vmatpush1.msra.mxu0 0.0
    %402 = vmatprep.subr.mxu0 0.0
    %403 = vmatpush1.msra.mxu0 0.0
    %404 = vmatprep.subr.mxu0 0.0
    %405 = vmatpush1.msra.mxu0 0.0
    %406 = vmatprep.subr.mxu0 0.0
    %407 = vmatpush1.msra.mxu0 0.0
    %408 = vmatprep.subr.mxu0 0.0
    %409 = vmatpush1.msra.mxu0 0.0
    %410 = vmatprep.mubr.f32.mxu0 0.0
    %411 = vmatmul.mubr.f32.gmra.mrb[0].mxu0 %v344
    %v412 = vpop.f32.mrb[0].mxu0
    %v413 = vadd.f32 %v263, %v412
    %v414 = vpop.f32.mrb[0].mxu0
    %415 = vdwg.mxu0
    %v417 = vsel %vm84, %v216, 0
    %419 = vmatprep.subr.mxu0 0.0
    %420 = vmatpush1.msra.mxu0 %v264
    %421 = vmatprep.subr.mxu0 0.0
    %422 = vmatpush1.msra.mxu0 0.0
    %423 = vmatprep.subr.mxu0 0.0
    %424 = vmatpush1.msra.mxu0 0.0
    %425 = vmatprep.subr.mxu0 0.0
    %426 = vmatpush1.msra.mxu0 0.0
    %427 = vmatprep.subr.mxu0 0.0
    %428 = vmatpush1.msra.mxu0 0.0
    %429 = vmatprep.subr.mxu0 0.0
    %430 = vmatpush1.msra.mxu0 0.0
    %431 = vmatprep.subr.mxu0 0.0
    %432 = vmatpush1.msra.mxu0 0.0
    %433 = vmatprep.subr.mxu0 0.0
    %434 = vmatpush1.msra.mxu0 0.0
    %435 = vmatprep.subr.mxu0 0.0
    %436 = vmatpush1.msra.mxu0 0.0
    %437 = vmatprep.subr.mxu0 0.0
    %438 = vmatpush1.msra.mxu0 0.0
    %439 = vmatprep.subr.mxu0 0.0
    %440 = vmatpush1.msra.mxu0 0.0
    %441 = vmatprep.subr.mxu0 0.0
    %442 = vmatpush1.msra.mxu0 0.0
    %443 = vmatprep.subr.mxu0 0.0
    %444 = vmatpush1.msra.mxu0 0.0
    %445 = vmatprep.subr.mxu0 0.0
    %446 = vmatpush1.msra.mxu0 0.0
    %447 = vmatprep.subr.mxu0 0.0
    %448 = vmatpush1.msra.mxu0 0.0
    %449 = vmatprep.subr.mxu0 0.0
    %450 = vmatpush1.msra.mxu0 0.0
    %451 = vmatprep.subr.mxu0 0.0
    %452 = vmatpush1.msra.mxu0 0.0
    %453 = vmatprep.subr.mxu0 0.0
    %454 = vmatpush1.msra.mxu0 0.0
    %455 = vmatprep.subr.mxu0 0.0
    %456 = vmatpush1.msra.mxu0 0.0
    %457 = vmatprep.subr.mxu0 0.0
    %458 = vmatpush1.msra.mxu0 0.0
    %459 = vmatprep.subr.mxu0 0.0
    %460 = vmatpush1.msra.mxu0 0.0
    %461 = vmatprep.subr.mxu0 0.0
    %462 = vmatpush1.msra.mxu0 0.0
    %463 = vmatprep.subr.mxu0 0.0
    %464 = vmatpush1.msra.mxu0 0.0
    %465 = vmatprep.subr.mxu0 0.0
    %466 = vmatpush1.msra.mxu0 0.0
    %467 = vmatprep.subr.mxu0 0.0
    %468 = vmatpush1.msra.mxu0 0.0
    %469 = vmatprep.subr.mxu0 0.0
    %470 = vmatpush1.msra.mxu0 0.0
    %471 = vmatprep.subr.mxu0 0.0
    %472 = vmatpush1.msra.mxu0 0.0
    %473 = vmatprep.subr.mxu0 0.0
    %474 = vmatpush1.msra.mxu0 0.0
    %475 = vmatprep.subr.mxu0 0.0
    %476 = vmatpush1.msra.mxu0 0.0
    %477 = vmatprep.subr.mxu0 0.0
    %478 = vmatpush1.msra.mxu0 0.0
    %479 = vmatprep.subr.mxu0 0.0
    %480 = vmatpush1.msra.mxu0 0.0
    %481 = vmatprep.subr.mxu0 0.0
    %482 = vmatpush1.msra.mxu0 0.0
    %483 = vmatprep.mubr.f32.mxu0 0.0
    %484 = vmatmul.mubr.f32.gmra.mrb[0].mxu0 %v417
    %v485 = vpop.f32.mrb[0].mxu0
    %v486 = vadd.f32 %v264, %v485
    %v487 = vpop.f32.mrb[0].mxu0
    %488 = vdwg.mxu0
    %v490 = vsel %vm84, %v217, 0
    %492 = vmatprep.subr.mxu0 0.0
    %493 = vmatpush1.msra.mxu0 %v265
    %494 = vmatprep.subr.mxu0 0.0
    %495 = vmatpush1.msra.mxu0 0.0
    %496 = vmatprep.subr.mxu0 0.0
    %497 = vmatpush1.msra.mxu0 0.0
    %498 = vmatprep.subr.mxu0 0.0
    %499 = vmatpush1.msra.mxu0 0.0
    %500 = vmatprep.subr.mxu0 0.0
    %501 = vmatpush1.msra.mxu0 0.0
    %502 = vmatprep.subr.mxu0 0.0
    %503 = vmatpush1.msra.mxu0 0.0
    %504 = vmatprep.subr.mxu0 0.0
    %505 = vmatpush1.msra.mxu0 0.0
    %506 = vmatprep.subr.mxu0 0.0
    %507 = vmatpush1.msra.mxu0 0.0
    %508 = vmatprep.subr.mxu0 0.0
    %509 = vmatpush1.msra.mxu0 0.0
    %510 = vmatprep.subr.mxu0 0.0
    %511 = vmatpush1.msra.mxu0 0.0
    %512 = vmatprep.subr.mxu0 0.0
    %513 = vmatpush1.msra.mxu0 0.0
    %514 = vmatprep.subr.mxu0 0.0
    %515 = vmatpush1.msra.mxu0 0.0
    %516 = vmatprep.subr.mxu0 0.0
    %517 = vmatpush1.msra.mxu0 0.0
    %518 = vmatprep.subr.mxu0 0.0
    %519 = vmatpush1.msra.mxu0 0.0
    %520 = vmatprep.subr.mxu0 0.0
    %521 = vmatpush1.msra.mxu0 0.0
    %522 = vmatprep.subr.mxu0 0.0
    %523 = vmatpush1.msra.mxu0 0.0
    %524 = vmatprep.subr.mxu0 0.0
    %525 = vmatpush1.msra.mxu0 0.0
    %526 = vmatprep.subr.mxu0 0.0
    %527 = vmatpush1.msra.mxu0 0.0
    %528 = vmatprep.subr.mxu0 0.0
    %529 = vmatpush1.msra.mxu0 0.0
    %530 = vmatprep.subr.mxu0 0.0
    %531 = vmatpush1.msra.mxu0 0.0
    %532 = vmatprep.subr.mxu0 0.0
    %533 = vmatpush1.msra.mxu0 0.0
    %534 = vmatprep.subr.mxu0 0.0
    %535 = vmatpush1.msra.mxu0 0.0
    %536 = vmatprep.subr.mxu0 0.0
    %537 = vmatpush1.msra.mxu0 0.0
    %538 = vmatprep.subr.mxu0 0.0
    %539 = vmatpush1.msra.mxu0 0.0
    %540 = vmatprep.subr.mxu0 0.0
    %541 = vmatpush1.msra.mxu0 0.0
    %542 = vmatprep.subr.mxu0 0.0
    %543 = vmatpush1.msra.mxu0 0.0
    %544 = vmatprep.subr.mxu0 0.0
    %545 = vmatpush1.msra.mxu0 0.0
    %546 = vmatprep.subr.mxu0 0.0
    %547 = vmatpush1.msra.mxu0 0.0
    %548 = vmatprep.subr.mxu0 0.0
    %549 = vmatpush1.msra.mxu0 0.0
    %550 = vmatprep.subr.mxu0 0.0
    %551 = vmatpush1.msra.mxu0 0.0
    %552 = vmatprep.subr.mxu0 0.0
    %553 = vmatpush1.msra.mxu0 0.0
    %554 = vmatprep.subr.mxu0 0.0
    %555 = vmatpush1.msra.mxu0 0.0
    %556 = vmatprep.mubr.f32.mxu0 0.0
    %557 = vmatmul.mubr.f32.gmra.mrb[0].mxu0 %v490
    %v558 = vpop.f32.mrb[0].mxu0
    %v559 = vadd.f32 %v265, %v558
    %v560 = vpop.f32.mrb[0].mxu0
    %561 = vdwg.mxu0
    %v563 = vsel %vm84, %v218, 0
    %565 = vmatprep.subr.mxu0 0.0
    %566 = vmatpush1.msra.mxu0 %v266
    %567 = vmatprep.subr.mxu0 0.0
    %568 = vmatpush1.msra.mxu0 0.0
    %569 = vmatprep.subr.mxu0 0.0
    %570 = vmatpush1.msra.mxu0 0.0
    %571 = vmatprep.subr.mxu0 0.0
    %572 = vmatpush1.msra.mxu0 0.0
    %573 = vmatprep.subr.mxu0 0.0
    %574 = vmatpush1.msra.mxu0 0.0
    %575 = vmatprep.subr.mxu0 0.0
    %576 = vmatpush1.msra.mxu0 0.0
    %577 = vmatprep.subr.mxu0 0.0
    %578 = vmatpush1.msra.mxu0 0.0
    %579 = vmatprep.subr.mxu0 0.0
    %580 = vmatpush1.msra.mxu0 0.0
    %581 = vmatprep.subr.mxu0 0.0
    %582 = vmatpush1.msra.mxu0 0.0
    %583 = vmatprep.subr.mxu0 0.0
    %584 = vmatpush1.msra.mxu0 0.0
    %585 = vmatprep.subr.mxu0 0.0
    %586 = vmatpush1.msra.mxu0 0.0
    %587 = vmatprep.subr.mxu0 0.0
    %588 = vmatpush1.msra.mxu0 0.0
    %589 = vmatprep.subr.mxu0 0.0
    %590 = vmatpush1.msra.mxu0 0.0
    %591 = vmatprep.subr.mxu0 0.0
    %592 = vmatpush1.msra.mxu0 0.0
    %593 = vmatprep.subr.mxu0 0.0
    %594 = vmatpush1.msra.mxu0 0.0
    %595 = vmatprep.subr.mxu0 0.0
    %596 = vmatpush1.msra.mxu0 0.0
    %597 = vmatprep.subr.mxu0 0.0
    %598 = vmatpush1.msra.mxu0 0.0
    %599 = vmatprep.subr.mxu0 0.0
    %600 = vmatpush1.msra.mxu0 0.0
    %601 = vmatprep.subr.mxu0 0.0
    %602 = vmatpush1.msra.mxu0 0.0
    %603 = vmatprep.subr.mxu0 0.0
    %604 = vmatpush1.msra.mxu0 0.0
    %605 = vmatprep.subr.mxu0 0.0
    %606 = vmatpush1.msra.mxu0 0.0
    %607 = vmatprep.subr.mxu0 0.0
    %608 = vmatpush1.msra.mxu0 0.0
    %609 = vmatprep.subr.mxu0 0.0
    %610 = vmatpush1.msra.mxu0 0.0
    %611 = vmatprep.subr.mxu0 0.0
    %612 = vmatpush1.msra.mxu0 0.0
    %613 = vmatprep.subr.mxu0 0.0
    %614 = vmatpush1.msra.mxu0 0.0
    %615 = vmatprep.subr.mxu0 0.0
    %616 = vmatpush1.msra.mxu0 0.0
    %617 = vmatprep.subr.mxu0 0.0
    %618 = vmatpush1.msra.mxu0 0.0
    %619 = vmatprep.subr.mxu0 0.0
    %620 = vmatpush1.msra.mxu0 0.0
    %621 = vmatprep.subr.mxu0 0.0
    %622 = vmatpush1.msra.mxu0 0.0
    %623 = vmatprep.subr.mxu0 0.0
    %624 = vmatpush1.msra.mxu0 0.0
    %625 = vmatprep.subr.mxu0 0.0
    %626 = vmatpush1.msra.mxu0 0.0
    %627 = vmatprep.subr.mxu0 0.0
    %628 = vmatpush1.msra.mxu0 0.0
    %629 = vmatprep.mubr.f32.mxu0 0.0
    %630 = vmatmul.mubr.f32.gmra.mrb[0].mxu0 %v563
    %v631 = vpop.f32.mrb[0].mxu0
    %v632 = vadd.f32 %v266, %v631
    %v633 = vpop.f32.mrb[0].mxu0
    %634 = vdwg.mxu0
    %v636 = vsel %vm84, %v219, 0
    %638 = vmatprep.subr.mxu0 0.0
    %639 = vmatpush1.msra.mxu0 %v267
    %640 = vmatprep.subr.mxu0 0.0
    %641 = vmatpush1.msra.mxu0 0.0
    %642 = vmatprep.subr.mxu0 0.0
    %643 = vmatpush1.msra.mxu0 0.0
    %644 = vmatprep.subr.mxu0 0.0
    %645 = vmatpush1.msra.mxu0 0.0
    %646 = vmatprep.subr.mxu0 0.0
    %647 = vmatpush1.msra.mxu0 0.0
    %648 = vmatprep.subr.mxu0 0.0
    %649 = vmatpush1.msra.mxu0 0.0
    %650 = vmatprep.subr.mxu0 0.0
    %651 = vmatpush1.msra.mxu0 0.0
    %652 = vmatprep.subr.mxu0 0.0
    %653 = vmatpush1.msra.mxu0 0.0
    %654 = vmatprep.subr.mxu0 0.0
    %655 = vmatpush1.msra.mxu0 0.0
    %656 = vmatprep.subr.mxu0 0.0
    %657 = vmatpush1.msra.mxu0 0.0
    %658 = vmatprep.subr.mxu0 0.0
    %659 = vmatpush1.msra.mxu0 0.0
    %660 = vmatprep.subr.mxu0 0.0
    %661 = vmatpush1.msra.mxu0 0.0
    %662 = vmatprep.subr.mxu0 0.0
    %663 = vmatpush1.msra.mxu0 0.0
    %664 = vmatprep.subr.mxu0 0.0
    %665 = vmatpush1.msra.mxu0 0.0
    %666 = vmatprep.subr.mxu0 0.0
    %667 = vmatpush1.msra.mxu0 0.0
    %668 = vmatprep.subr.mxu0 0.0
    %669 = vmatpush1.msra.mxu0 0.0
    %670 = vmatprep.subr.mxu0 0.0
    %671 = vmatpush1.msra.mxu0 0.0
    %672 = vmatprep.subr.mxu0 0.0
    %673 = vmatpush1.msra.mxu0 0.0
    %674 = vmatprep.subr.mxu0 0.0
    %675 = vmatpush1.msra.mxu0 0.0
    %676 = vmatprep.subr.mxu0 0.0
    %677 = vmatpush1.msra.mxu0 0.0
    %678 = vmatprep.subr.mxu0 0.0
    %679 = vmatpush1.msra.mxu0 0.0
    %680 = vmatprep.subr.mxu0 0.0
    %681 = vmatpush1.msra.mxu0 0.0
    %682 = vmatprep.subr.mxu0 0.0
    %683 = vmatpush1.msra.mxu0 0.0
    %684 = vmatprep.subr.mxu0 0.0
    %685 = vmatpush1.msra.mxu0 0.0
    %686 = vmatprep.subr.mxu0 0.0
    %687 = vmatpush1.msra.mxu0 0.0
    %688 = vmatprep.subr.mxu0 0.0
    %689 = vmatpush1.msra.mxu0 0.0
    %690 = vmatprep.subr.mxu0 0.0
    %691 = vmatpush1.msra.mxu0 0.0
    %692 = vmatprep.subr.mxu0 0.0
    %693 = vmatpush1.msra.mxu0 0.0
    %694 = vmatprep.subr.mxu0 0.0
    %695 = vmatpush1.msra.mxu0 0.0
    %696 = vmatprep.subr.mxu0 0.0
    %697 = vmatpush1.msra.mxu0 0.0
    %698 = vmatprep.subr.mxu0 0.0
    %699 = vmatpush1.msra.mxu0 0.0
    %700 = vmatprep.subr.mxu0 0.0
    %701 = vmatpush1.msra.mxu0 0.0
    %702 = vmatprep.mubr.f32.mxu0 0.0
    %703 = vmatmul.mubr.f32.gmra.mrb[0].mxu0 %v636
    %v704 = vpop.f32.mrb[0].mxu0
    %v705 = vadd.f32 %v267, %v704
    %v706 = vpop.f32.mrb[0].mxu0
    %707 = vdwg.mxu0
    %v709 = vsel %vm84, %v220, 0
    %711 = vmatprep.subr.mxu0 0.0
    %712 = vmatpush1.msra.mxu0 %v268
    %713 = vmatprep.subr.mxu0 0.0
    %714 = vmatpush1.msra.mxu0 0.0
    %715 = vmatprep.subr.mxu0 0.0
    %716 = vmatpush1.msra.mxu0 0.0
    %717 = vmatprep.subr.mxu0 0.0
    %718 = vmatpush1.msra.mxu0 0.0
    %719 = vmatprep.subr.mxu0 0.0
    %720 = vmatpush1.msra.mxu0 0.0
    %721 = vmatprep.subr.mxu0 0.0
    %722 = vmatpush1.msra.mxu0 0.0
    %723 = vmatprep.subr.mxu0 0.0
    %724 = vmatpush1.msra.mxu0 0.0
    %725 = vmatprep.subr.mxu0 0.0
    %726 = vmatpush1.msra.mxu0 0.0
    %727 = vmatprep.subr.mxu0 0.0
    %728 = vmatpush1.msra.mxu0 0.0
    %729 = vmatprep.subr.mxu0 0.0
    %730 = vmatpush1.msra.mxu0 0.0
    %731 = vmatprep.subr.mxu0 0.0
    %732 = vmatpush1.msra.mxu0 0.0
    %733 = vmatprep.subr.mxu0 0.0
    %734 = vmatpush1.msra.mxu0 0.0
    %735 = vmatprep.subr.mxu0 0.0
    %736 = vmatpush1.msra.mxu0 0.0
    %737 = vmatprep.subr.mxu0 0.0
    %738 = vmatpush1.msra.mxu0 0.0
    %739 = vmatprep.subr.mxu0 0.0
    %740 = vmatpush1.msra.mxu0 0.0
    %741 = vmatprep.subr.mxu0 0.0
    %742 = vmatpush1.msra.mxu0 0.0
    %743 = vmatprep.subr.mxu0 0.0
    %744 = vmatpush1.msra.mxu0 0.0
    %745 = vmatprep.subr.mxu0 0.0
    %746 = vmatpush1.msra.mxu0 0.0
    %747 = vmatprep.subr.mxu0 0.0
    %748 = vmatpush1.msra.mxu0 0.0
    %749 = vmatprep.subr.mxu0 0.0
    %750 = vmatpush1.msra.mxu0 0.0
    %751 = vmatprep.subr.mxu0 0.0
    %752 = vmatpush1.msra.mxu0 0.0
    %753 = vmatprep.subr.mxu0 0.0
    %754 = vmatpush1.msra.mxu0 0.0
    %755 = vmatprep.subr.mxu0 0.0
    %756 = vmatpush1.msra.mxu0 0.0
    %757 = vmatprep.subr.mxu0 0.0
    %758 = vmatpush1.msra.mxu0 0.0
    %759 = vmatprep.subr.mxu0 0.0
    %760 = vmatpush1.msra.mxu0 0.0
    %761 = vmatprep.subr.mxu0 0.0
    %762 = vmatpush1.msra.mxu0 0.0
    %763 = vmatprep.subr.mxu0 0.0
    %764 = vmatpush1.msra.mxu0 0.0
    %765 = vmatprep.subr.mxu0 0.0
    %766 = vmatpush1.msra.mxu0 0.0
    %767 = vmatprep.subr.mxu0 0.0
    %768 = vmatpush1.msra.mxu0 0.0
    %769 = vmatprep.subr.mxu0 0.0
    %770 = vmatpush1.msra.mxu0 0.0
    %771 = vmatprep.subr.mxu0 0.0
    %772 = vmatpush1.msra.mxu0 0.0
    %773 = vmatprep.subr.mxu0 0.0
    %774 = vmatpush1.msra.mxu0 0.0
    %775 = vmatprep.mubr.f32.mxu0 0.0
    %776 = vmatmul.mubr.f32.gmra.mrb[0].mxu0 %v709
    %v777 = vpop.f32.mrb[0].mxu0
    %v778 = vadd.f32 %v268, %v777
    %v779 = vpop.f32.mrb[0].mxu0
    %780 = vdwg.mxu0
    %v782 = vsel %vm84, %v221, 0
    %784 = vmatprep.subr.mxu0 0.0
    %785 = vmatpush1.msra.mxu0 %v269
    %786 = vmatprep.subr.mxu0 0.0
    %787 = vmatpush1.msra.mxu0 0.0
    %788 = vmatprep.subr.mxu0 0.0
    %789 = vmatpush1.msra.mxu0 0.0
    %790 = vmatprep.subr.mxu0 0.0
    %791 = vmatpush1.msra.mxu0 0.0
    %792 = vmatprep.subr.mxu0 0.0
    %793 = vmatpush1.msra.mxu0 0.0
    %794 = vmatprep.subr.mxu0 0.0
    %795 = vmatpush1.msra.mxu0 0.0
    %796 = vmatprep.subr.mxu0 0.0
    %797 = vmatpush1.msra.mxu0 0.0
    %798 = vmatprep.subr.mxu0 0.0
    %799 = vmatpush1.msra.mxu0 0.0
    %800 = vmatprep.subr.mxu0 0.0
    %801 = vmatpush1.msra.mxu0 0.0
    %802 = vmatprep.subr.mxu0 0.0
    %803 = vmatpush1.msra.mxu0 0.0
    %804 = vmatprep.subr.mxu0 0.0
    %805 = vmatpush1.msra.mxu0 0.0
    %806 = vmatprep.subr.mxu0 0.0
    %807 = vmatpush1.msra.mxu0 0.0
    %808 = vmatprep.subr.mxu0 0.0
    %809 = vmatpush1.msra.mxu0 0.0
    %810 = vmatprep.subr.mxu0 0.0
    %811 = vmatpush1.msra.mxu0 0.0
    %812 = vmatprep.subr.mxu0 0.0
    %813 = vmatpush1.msra.mxu0 0.0
    %814 = vmatprep.subr.mxu0 0.0
    %815 = vmatpush1.msra.mxu0 0.0
    %816 = vmatprep.subr.mxu0 0.0
    %817 = vmatpush1.msra.mxu0 0.0
    %818 = vmatprep.subr.mxu0 0.0
    %819 = vmatpush1.msra.mxu0 0.0
    %820 = vmatprep.subr.mxu0 0.0
    %821 = vmatpush1.msra.mxu0 0.0
    %822 = vmatprep.subr.mxu0 0.0
    %823 = vmatpush1.msra.mxu0 0.0
    %824 = vmatprep.subr.mxu0 0.0
    %825 = vmatpush1.msra.mxu0 0.0
    %826 = vmatprep.subr.mxu0 0.0
    %827 = vmatpush1.msra.mxu0 0.0
    %828 = vmatprep.subr.mxu0 0.0
    %829 = vmatpush1.msra.mxu0 0.0
    %830 = vmatprep.subr.mxu0 0.0
    %831 = vmatpush1.msra.mxu0 0.0
    %832 = vmatprep.subr.mxu0 0.0
    %833 = vmatpush1.msra.mxu0 0.0
    %834 = vmatprep.subr.mxu0 0.0
    %835 = vmatpush1.msra.mxu0 0.0
    %836 = vmatprep.subr.mxu0 0.0
    %837 = vmatpush1.msra.mxu0 0.0
    %838 = vmatprep.subr.mxu0 0.0
    %839 = vmatpush1.msra.mxu0 0.0
    %840 = vmatprep.subr.mxu0 0.0
    %841 = vmatpush1.msra.mxu0 0.0
    %842 = vmatprep.subr.mxu0 0.0
    %843 = vmatpush1.msra.mxu0 0.0
    %844 = vmatprep.subr.mxu0 0.0
    %845 = vmatpush1.msra.mxu0 0.0
    %846 = vmatprep.subr.mxu0 0.0
    %847 = vmatpush1.msra.mxu0 0.0
    %848 = vmatprep.mubr.f32.mxu0 0.0
    %849 = vmatmul.mubr.f32.gmra.mrb[0].mxu0 %v782
    %v850 = vpop.f32.mrb[0].mxu0
    %v851 = vadd.f32 %v269, %v850
    %v852 = vpop.f32.mrb[0].mxu0
    %853 = vdwg.mxu0
    %v854 = vmul.f32 %v254, %v340
    %v855 = vmul.f32 %v255, %v413
    %v856 = vmul.f32 %v256, %v486
    %v857 = vmul.f32 %v257, %v559
    %v858 = vmul.f32 %v258, %v632
    %v859 = vmul.f32 %v259, %v705
    %v860 = vmul.f32 %v260, %v778
    %v861 = vmul.f32 %v261, %v851
    %v862 = vld [vmem:[%s4] sm:$0x1]
    %v864 = vlaneseq
    %v865 = vshrl.u32 %v864, 7
    %v866 = vsub.s32 0, %v865
    %v867 = vrot.slane %v862, %v866
    %v869 = vadd.f32 %v854, %v867
    %v870 = vadd.f32 %v855, %v867
    %v871 = vadd.f32 %v856, %v867
    %v872 = vadd.f32 %v857, %v867
    %v873 = vadd.f32 %v858, %v867
    %v874 = vadd.f32 %v859, %v867
    %v875 = vadd.f32 %v860, %v867
    %v876 = vadd.f32 %v861, %v867
    %v877 = vld [vmem:[%s2] sm:$0xff]
    %v878 = vld [vmem:[%s2 + $0x8] sm:$0xff]
    %v879 = vld [vmem:[%s2 + $0x10] sm:$0xff]
    %v880 = vld [vmem:[%s2 + $0x18] sm:$0xff]
    %v881 = vld [vmem:[%s2 + $0x20] sm:$0xff]
    %vm882 = vcmask 523264
    %v884 = vsel %vm882, %v877, 0
    %v887 = vsel %vm882, %v878, 0
    %v890 = vsel %vm882, %v879, 0
    %v893 = vsel %vm882, %v880, 0
    %v896 = vsel %vm882, %v881, 0
    %898 = vmatprep.subr.mxu0 0.0
    %899 = vmatpush1.msra.mxu0 %v869
    %900 = vmatprep.subr.mxu0 0.0
    %901 = vmatpush1.msra.mxu0 %v870
    %902 = vmatprep.subr.mxu0 0.0
    %903 = vmatpush1.msra.mxu0 %v871
    %904 = vmatprep.subr.mxu0 0.0
    %905 = vmatpush1.msra.mxu0 %v872
    %906 = vmatprep.subr.mxu0 0.0
    %907 = vmatpush1.msra.mxu0 %v873
    %908 = vmatprep.subr.mxu0 0.0
    %909 = vmatpush1.msra.mxu0 %v874
    %910 = vmatprep.subr.mxu0 0.0
    %911 = vmatpush1.msra.mxu0 %v875
    %912 = vmatprep.subr.mxu0 0.0
    %913 = vmatpush1.msra.mxu0 %v876
    %914 = vmatprep.subr.mxu0 0.0
    %915 = vmatpush1.msra.mxu0 0.0
    %916 = vmatprep.subr.mxu0 0.0
    %917 = vmatpush1.msra.mxu0 0.0
    %918 = vmatprep.subr.mxu0 0.0
    %919 = vmatpush1.msra.mxu0 0.0
    %920 = vmatprep.subr.mxu0 0.0
    %921 = vmatpush1.msra.mxu0 0.0
    %922 = vmatprep.subr.mxu0 0.0
    %923 = vmatpush1.msra.mxu0 0.0
    %924 = vmatprep.subr.mxu0 0.0
    %925 = vmatpush1.msra.mxu0 0.0
    %926 = vmatprep.subr.mxu0 0.0
    %927 = vmatpush1.msra.mxu0 0.0
    %928 = vmatprep.subr.mxu0 0.0
    %929 = vmatpush1.msra.mxu0 0.0
    %930 = vmatprep.subr.mxu0 0.0
    %931 = vmatpush1.msra.mxu0 0.0
    %932 = vmatprep.subr.mxu0 0.0
    %933 = vmatpush1.msra.mxu0 0.0
    %934 = vmatprep.subr.mxu0 0.0
    %935 = vmatpush1.msra.mxu0 0.0
    %936 = vmatprep.subr.mxu0 0.0
    %937 = vmatpush1.msra.mxu0 0.0
    %938 = vmatprep.subr.mxu0 0.0
    %939 = vmatpush1.msra.mxu0 0.0
    %940 = vmatprep.subr.mxu0 0.0
    %941 = vmatpush1.msra.mxu0 0.0
    %942 = vmatprep.subr.mxu0 0.0
    %943 = vmatpush1.msra.mxu0 0.0
    %944 = vmatprep.subr.mxu0 0.0
    %945 = vmatpush1.msra.mxu0 0.0
    %946 = vmatprep.subr.mxu0 0.0
    %947 = vmatpush1.msra.mxu0 0.0
    %948 = vmatprep.subr.mxu0 0.0
    %949 = vmatpush1.msra.mxu0 0.0
    %950 = vmatprep.subr.mxu0 0.0
    %951 = vmatpush1.msra.mxu0 0.0
    %952 = vmatprep.subr.mxu0 0.0
    %953 = vmatpush1.msra.mxu0 0.0
    %954 = vmatprep.subr.mxu0 0.0
    %955 = vmatpush1.msra.mxu0 0.0
    %956 = vmatprep.subr.mxu0 0.0
    %957 = vmatpush1.msra.mxu0 0.0
    %958 = vmatprep.subr.mxu0 0.0
    %959 = vmatpush1.msra.mxu0 0.0
    %960 = vmatprep.subr.mxu0 0.0
    %961 = vmatpush1.msra.mxu0 0.0
    %962 = vmatprep.mubr.f32.mxu0 0.0
    %963 = vmatmul.mubr.f32.gmra.mrb[0].mxu0 %v884
    %v964 = vpop.f32.mrb[0].mxu0
    %v965 = vadd.f32 0.0, %v964
    %v966 = vpop.f32.mrb[0].mxu0
    %967 = vmatprep.mubr.f32.mxu0 0.0
    %968 = vmatmul.mubr.f32.gmra.mrb[0].mxu0 %v887
    %v969 = vpop.f32.mrb[0].mxu0
    %v970 = vadd.f32 0.0, %v969
    %v971 = vpop.f32.mrb[0].mxu0
    %972 = vmatprep.mubr.f32.mxu0 0.0
    %973 = vmatmul.mubr.f32.gmra.mrb[0].mxu0 %v890
    %v974 = vpop.f32.mrb[0].mxu0
    %v975 = vadd.f32 0.0, %v974
    %v976 = vpop.f32.mrb[0].mxu0
    %977 = vmatprep.mubr.f32.mxu0 0.0
    %978 = vmatmul.mubr.f32.gmra.mrb[0].mxu0 %v893
    %v979 = vpop.f32.mrb[0].mxu0
    %v980 = vadd.f32 0.0, %v979
    %v981 = vpop.f32.mrb[0].mxu0
    %982 = vmatprep.mubr.f32.mxu0 0.0
    %983 = vmatmul.mubr.f32.gmra.mrb[0].mxu0 %v896
    %v984 = vpop.f32.mrb[0].mxu0
    %v985 = vadd.f32 0.0, %v984
    %v986 = vpop.f32.mrb[0].mxu0
    %987 = vdwg.mxu0
    %988 = vmatprep.subr.mxu0 0.0
    %989 = vmatpush1.msra.mxu0 %v75
    %990 = vmatprep.subr.mxu0 0.0
    %991 = vmatpush1.msra.mxu0 %v76
    %992 = vmatprep.subr.mxu0 0.0
    %993 = vmatpush1.msra.mxu0 %v77
    %994 = vmatprep.subr.mxu0 0.0
    %995 = vmatpush1.msra.mxu0 %v78
    %996 = vmatprep.subr.mxu0 0.0
    %997 = vmatpush1.msra.mxu0 %v79
    %998 = vmatprep.subr.mxu0 0.0
    %999 = vmatpush1.msra.mxu0 %v80
    %1000 = vmatprep.subr.mxu0 0.0
    %1001 = vmatpush1.msra.mxu0 %v81
    %1002 = vmatprep.subr.mxu0 0.0
    %1003 = vmatpush1.msra.mxu0 %v82
    %1004 = vmatprep.subr.mxu0 0.0
    %1005 = vmatpush1.msra.mxu0 0.0
    %1006 = vmatprep.subr.mxu0 0.0
    %1007 = vmatpush1.msra.mxu0 0.0
    %1008 = vmatprep.subr.mxu0 0.0
    %1009 = vmatpush1.msra.mxu0 0.0
    %1010 = vmatprep.subr.mxu0 0.0
    %1011 = vmatpush1.msra.mxu0 0.0
    %1012 = vmatprep.subr.mxu0 0.0
    %1013 = vmatpush1.msra.mxu0 0.0
    %1014 = vmatprep.subr.mxu0 0.0
    %1015 = vmatpush1.msra.mxu0 0.0
    %1016 = vmatprep.subr.mxu0 0.0
    %1017 = vmatpush1.msra.mxu0 0.0
    %1018 = vmatprep.subr.mxu0 0.0
    %1019 = vmatpush1.msra.mxu0 0.0
    %1020 = vmatprep.subr.mxu0 0.0
    %1021 = vmatpush1.msra.mxu0 0.0
    %1022 = vmatprep.subr.mxu0 0.0
    %1023 = vmatpush1.msra.mxu0 0.0
    %1024 = vmatprep.subr.mxu0 0.0
    %1025 = vmatpush1.msra.mxu0 0.0
    %1026 = vmatprep.subr.mxu0 0.0
    %1027 = vmatpush1.msra.mxu0 0.0
    %1028 = vmatprep.subr.mxu0 0.0
    %1029 = vmatpush1.msra.mxu0 0.0
    %1030 = vmatprep.subr.mxu0 0.0
    %1031 = vmatpush1.msra.mxu0 0.0
    %1032 = vmatprep.subr.mxu0 0.0
    %1033 = vmatpush1.msra.mxu0 0.0
    %1034 = vmatprep.subr.mxu0 0.0
    %1035 = vmatpush1.msra.mxu0 0.0
    %1036 = vmatprep.subr.mxu0 0.0
    %1037 = vmatpush1.msra.mxu0 0.0
    %1038 = vmatprep.subr.mxu0 0.0
    %1039 = vmatpush1.msra.mxu0 0.0
    %1040 = vmatprep.subr.mxu0 0.0
    %1041 = vmatpush1.msra.mxu0 0.0
    %1042 = vmatprep.subr.mxu0 0.0
    %1043 = vmatpush1.msra.mxu0 0.0
    %1044 = vmatprep.subr.mxu0 0.0
    %1045 = vmatpush1.msra.mxu0 0.0
    %1046 = vmatprep.subr.mxu0 0.0
    %1047 = vmatpush1.msra.mxu0 0.0
    %1048 = vmatprep.subr.mxu0 0.0
    %1049 = vmatpush1.msra.mxu0 0.0
    %1050 = vmatprep.subr.mxu0 0.0
    %1051 = vmatpush1.msra.mxu0 0.0
    %1052 = vmatprep.mubr.f32.mxu0 0.0
    %1053 = vmatmul.mubr.f32.gmra.mrb[0].mxu0 %v884
    %v1054 = vpop.f32.mrb[0].mxu0
    %v1055 = vadd.f32 0.0, %v1054
    %v1056 = vpop.f32.mrb[0].mxu0
    %1057 = vmatprep.mubr.f32.mxu0 0.0
    %1058 = vmatmul.mubr.f32.gmra.mrb[0].mxu0 %v887
    %v1059 = vpop.f32.mrb[0].mxu0
    %v1060 = vadd.f32 0.0, %v1059
    %v1061 = vpop.f32.mrb[0].mxu0
    %1062 = vmatprep.mubr.f32.mxu0 0.0
    %1063 = vmatmul.mubr.f32.gmra.mrb[0].mxu0 %v890
    %v1064 = vpop.f32.mrb[0].mxu0
    %v1065 = vadd.f32 0.0, %v1064
    %v1066 = vpop.f32.mrb[0].mxu0
    %1067 = vmatprep.mubr.f32.mxu0 0.0
    %1068 = vmatmul.mubr.f32.gmra.mrb[0].mxu0 %v893
    %v1069 = vpop.f32.mrb[0].mxu0
    %v1070 = vadd.f32 0.0, %v1069
    %v1071 = vpop.f32.mrb[0].mxu0
    %1072 = vmatprep.mubr.f32.mxu0 0.0
    %1073 = vmatmul.mubr.f32.gmra.mrb[0].mxu0 %v896
    %v1074 = vpop.f32.mrb[0].mxu0
    %v1075 = vadd.f32 0.0, %v1074
    %v1076 = vpop.f32.mrb[0].mxu0
    %1077 = vdwg.mxu0
    %v1078 = vld [vmem:[%s5] sm:$0xff]
    %v1079 = vld [vmem:[%s5 + $0x8] sm:$0xff]
    %v1080 = vld [vmem:[%s6] sm:$0xff]
    %v1082 = vsel %vm84, %v1055, 0
    %v1085 = vsel %vm84, %v1060, 0
    %v1088 = vsel %vm84, %v1065, 0
    %v1091 = vsel %vm84, %v1070, 0
    %v1094 = vsel %vm84, %v1075, 0
    %1096 = vmatprep.subr.mxu0 0.0
    %1097 = vmatpush1.msra.mxu0 %v1080
    %1098 = vmatprep.subr.mxu0 0.0
    %1099 = vmatpush1.msra.mxu0 0.0
    %1100 = vmatprep.subr.mxu0 0.0
    %1101 = vmatpush1.msra.mxu0 0.0
    %1102 = vmatprep.subr.mxu0 0.0
    %1103 = vmatpush1.msra.mxu0 0.0
    %1104 = vmatprep.subr.mxu0 0.0
    %1105 = vmatpush1.msra.mxu0 0.0
    %1106 = vmatprep.subr.mxu0 0.0
    %1107 = vmatpush1.msra.mxu0 0.0
    %1108 = vmatprep.subr.mxu0 0.0
    %1109 = vmatpush1.msra.mxu0 0.0
    %1110 = vmatprep.subr.mxu0 0.0
    %1111 = vmatpush1.msra.mxu0 0.0
    %1112 = vmatprep.subr.mxu0 0.0
    %1113 = vmatpush1.msra.mxu0 0.0
    %1114 = vmatprep.subr.mxu0 0.0
    %1115 = vmatpush1.msra.mxu0 0.0
    %1116 = vmatprep.subr.mxu0 0.0
    %1117 = vmatpush1.msra.mxu0 0.0
    %1118 = vmatprep.subr.mxu0 0.0
    %1119 = vmatpush1.msra.mxu0 0.0
    %1120 = vmatprep.subr.mxu0 0.0
    %1121 = vmatpush1.msra.mxu0 0.0
    %1122 = vmatprep.subr.mxu0 0.0
    %1123 = vmatpush1.msra.mxu0 0.0
    %1124 = vmatprep.subr.mxu0 0.0
    %1125 = vmatpush1.msra.mxu0 0.0
    %1126 = vmatprep.subr.mxu0 0.0
    %1127 = vmatpush1.msra.mxu0 0.0
    %1128 = vmatprep.subr.mxu0 0.0
    %1129 = vmatpush1.msra.mxu0 0.0
    %1130 = vmatprep.subr.mxu0 0.0
    %1131 = vmatpush1.msra.mxu0 0.0
    %1132 = vmatprep.subr.mxu0 0.0
    %1133 = vmatpush1.msra.mxu0 0.0
    %1134 = vmatprep.subr.mxu0 0.0
    %1135 = vmatpush1.msra.mxu0 0.0
    %1136 = vmatprep.subr.mxu0 0.0
    %1137 = vmatpush1.msra.mxu0 0.0
    %1138 = vmatprep.subr.mxu0 0.0
    %1139 = vmatpush1.msra.mxu0 0.0
    %1140 = vmatprep.subr.mxu0 0.0
    %1141 = vmatpush1.msra.mxu0 0.0
    %1142 = vmatprep.subr.mxu0 0.0
    %1143 = vmatpush1.msra.mxu0 0.0
    %1144 = vmatprep.subr.mxu0 0.0
    %1145 = vmatpush1.msra.mxu0 0.0
    %1146 = vmatprep.subr.mxu0 0.0
    %1147 = vmatpush1.msra.mxu0 0.0
    %1148 = vmatprep.subr.mxu0 0.0
    %1149 = vmatpush1.msra.mxu0 0.0
    %1150 = vmatprep.subr.mxu0 0.0
    %1151 = vmatpush1.msra.mxu0 0.0
    %1152 = vmatprep.subr.mxu0 0.0
    %1153 = vmatpush1.msra.mxu0 0.0
    %1154 = vmatprep.subr.mxu0 0.0
    %1155 = vmatpush1.msra.mxu0 0.0
    %1156 = vmatprep.subr.mxu0 0.0
    %1157 = vmatpush1.msra.mxu0 0.0
    %1158 = vmatprep.subr.mxu0 0.0
    %1159 = vmatpush1.msra.mxu0 0.0
    %1160 = vmatprep.mubr.f32.mxu0 0.0
    %1161 = vmatmul.mubr.f32.gmra.mrb[0].mxu0 %v1082
    %v1162 = vpop.f32.mrb[0].mxu0
    %v1163 = vadd.f32 0.0, %v1162
    %v1164 = vpop.f32.mrb[0].mxu0
    %1165 = vmatprep.mubr.f32.mxu0 0.0
    %1166 = vmatmul.mubr.f32.gmra.mrb[0].mxu0 %v1085
    %v1167 = vpop.f32.mrb[0].mxu0
    %v1168 = vadd.f32 0.0, %v1167
    %v1169 = vpop.f32.mrb[0].mxu0
    %1170 = vmatprep.mubr.f32.mxu0 0.0
    %1171 = vmatmul.mubr.f32.gmra.mrb[0].mxu0 %v1088
    %v1172 = vpop.f32.mrb[0].mxu0
    %v1173 = vadd.f32 0.0, %v1172
    %v1174 = vpop.f32.mrb[0].mxu0
    %1175 = vmatprep.mubr.f32.mxu0 0.0
    %1176 = vmatmul.mubr.f32.gmra.mrb[0].mxu0 %v1091
    %v1177 = vpop.f32.mrb[0].mxu0
    %v1178 = vadd.f32 0.0, %v1177
    %v1179 = vpop.f32.mrb[0].mxu0
    %1180 = vmatprep.mubr.f32.mxu0 0.0
    %1181 = vmatmul.mubr.f32.gmra.mrb[0].mxu0 %v1094
    %v1182 = vpop.f32.mrb[0].mxu0
    %v1183 = vadd.f32 0.0, %v1182
    %v1184 = vpop.f32.mrb[0].mxu0
    %1185 = vdwg.mxu0
    %vm1186 = vcmask 130048
    %v1188 = vsel %vm1186, %v965, 0
    %v1191 = vsel %vm1186, %v970, 0
    %v1194 = vsel %vm1186, %v975, 0
    %v1197 = vsel %vm1186, %v980, 0
    %v1200 = vsel %vm1186, %v985, 0
    %1202 = vmatprep.subr.mxu0 0.0
    %1203 = vmatpush1.msra.mxu0 %v1078
    %1204 = vmatprep.subr.mxu0 0.0
    %1205 = vmatpush1.msra.mxu0 %v1079
    %1206 = vmatprep.subr.mxu0 0.0
    %1207 = vmatpush1.msra.mxu0 0.0
    %1208 = vmatprep.subr.mxu0 0.0
    %1209 = vmatpush1.msra.mxu0 0.0
    %1210 = vmatprep.subr.mxu0 0.0
    %1211 = vmatpush1.msra.mxu0 0.0
    %1212 = vmatprep.subr.mxu0 0.0
    %1213 = vmatpush1.msra.mxu0 0.0
    %1214 = vmatprep.subr.mxu0 0.0
    %1215 = vmatpush1.msra.mxu0 0.0
    %1216 = vmatprep.subr.mxu0 0.0
    %1217 = vmatpush1.msra.mxu0 0.0
    %1218 = vmatprep.subr.mxu0 0.0
    %1219 = vmatpush1.msra.mxu0 0.0
    %1220 = vmatprep.subr.mxu0 0.0
    %1221 = vmatpush1.msra.mxu0 0.0
    %1222 = vmatprep.subr.mxu0 0.0
    %1223 = vmatpush1.msra.mxu0 0.0
    %1224 = vmatprep.subr.mxu0 0.0
    %1225 = vmatpush1.msra.mxu0 0.0
    %1226 = vmatprep.subr.mxu0 0.0
    %1227 = vmatpush1.msra.mxu0 0.0
    %1228 = vmatprep.subr.mxu0 0.0
    %1229 = vmatpush1.msra.mxu0 0.0
    %1230 = vmatprep.subr.mxu0 0.0
    %1231 = vmatpush1.msra.mxu0 0.0
    %1232 = vmatprep.subr.mxu0 0.0
    %1233 = vmatpush1.msra.mxu0 0.0
    %1234 = vmatprep.subr.mxu0 0.0
    %1235 = vmatpush1.msra.mxu0 0.0
    %1236 = vmatprep.subr.mxu0 0.0
    %1237 = vmatpush1.msra.mxu0 0.0
    %1238 = vmatprep.subr.mxu0 0.0
    %1239 = vmatpush1.msra.mxu0 0.0
    %1240 = vmatprep.subr.mxu0 0.0
    %1241 = vmatpush1.msra.mxu0 0.0
    %1242 = vmatprep.subr.mxu0 0.0
    %1243 = vmatpush1.msra.mxu0 0.0
    %1244 = vmatprep.subr.mxu0 0.0
    %1245 = vmatpush1.msra.mxu0 0.0
    %1246 = vmatprep.subr.mxu0 0.0
    %1247 = vmatpush1.msra.mxu0 0.0
    %1248 = vmatprep.subr.mxu0 0.0
    %1249 = vmatpush1.msra.mxu0 0.0
    %1250 = vmatprep.subr.mxu0 0.0
    %1251 = vmatpush1.msra.mxu0 0.0
    %1252 = vmatprep.subr.mxu0 0.0
    %1253 = vmatpush1.msra.mxu0 0.0
    %1254 = vmatprep.subr.mxu0 0.0
    %1255 = vmatpush1.msra.mxu0 0.0
    %1256 = vmatprep.subr.mxu0 0.0
    %1257 = vmatpush1.msra.mxu0 0.0
    %1258 = vmatprep.subr.mxu0 0.0
    %1259 = vmatpush1.msra.mxu0 0.0
    %1260 = vmatprep.subr.mxu0 0.0
    %1261 = vmatpush1.msra.mxu0 0.0
    %1262 = vmatprep.subr.mxu0 0.0
    %1263 = vmatpush1.msra.mxu0 0.0
    %1264 = vmatprep.subr.mxu0 0.0
    %1265 = vmatpush1.msra.mxu0 0.0
    %1266 = vmatprep.mubr.f32.mxu0 0.0
    %1267 = vmatmul.mubr.f32.gmra.mrb[0].mxu0 %v1188
    %v1268 = vpop.f32.mrb[0].mxu0
    %v1269 = vadd.f32 %v1163, %v1268
    %v1270 = vpop.f32.mrb[0].mxu0
    %1271 = vmatprep.mubr.f32.mxu0 0.0
    %1272 = vmatmul.mubr.f32.gmra.mrb[0].mxu0 %v1191
    %v1273 = vpop.f32.mrb[0].mxu0
    %v1274 = vadd.f32 %v1168, %v1273
    %v1275 = vpop.f32.mrb[0].mxu0
    %1276 = vmatprep.mubr.f32.mxu0 0.0
    %1277 = vmatmul.mubr.f32.gmra.mrb[0].mxu0 %v1194
    %v1278 = vpop.f32.mrb[0].mxu0
    %v1279 = vadd.f32 %v1173, %v1278
    %v1280 = vpop.f32.mrb[0].mxu0
    %1281 = vmatprep.mubr.f32.mxu0 0.0
    %1282 = vmatmul.mubr.f32.gmra.mrb[0].mxu0 %v1197
    %v1283 = vpop.f32.mrb[0].mxu0
    %v1284 = vadd.f32 %v1178, %v1283
    %v1285 = vpop.f32.mrb[0].mxu0
    %1286 = vmatprep.mubr.f32.mxu0 0.0
    %1287 = vmatmul.mubr.f32.gmra.mrb[0].mxu0 %v1200
    %v1288 = vpop.f32.mrb[0].mxu0
    %v1289 = vadd.f32 %v1183, %v1288
    %v1290 = vpop.f32.mrb[0].mxu0
    %1291 = vdwg.mxu0
    %v1292 = vld [vmem:[%s8] sm:$0x1]
    %v1294 = vlaneseq
    %v1295 = vshrl.u32 %v1294, 7
    %v1296 = vsub.s32 0, %v1295
    %v1297 = vrot.slane %v1292, %v1296
    %v1299 = vadd.f32 %v1269, %v1297
    %v1300 = vadd.f32 %v1274, %v1297
    %v1301 = vadd.f32 %v1279, %v1297
    %v1302 = vadd.f32 %v1284, %v1297
    %v1303 = vadd.f32 %v1289, %v1297
    %v1304 = vld [vmem:[%s7] sm:$0xff]
    %v1305 = vld [vmem:[%s7 + $0x8] sm:$0xff]
    %v1306 = vld [vmem:[%s7 + $0x10] sm:$0xff]
    %v1307 = vld [vmem:[%s7 + $0x18] sm:$0xff]
    %vm1308 = vcmask 261120
    %v1310 = vsel %vm1308, 0.0, 0
    %1312 = vmatprep.subr.mxu0 0.0
    %1313 = vmatpush1.msra.mxu0 %v1304
    %1314 = vmatprep.subr.mxu0 0.0
    %1315 = vmatpush1.msra.mxu0 %v1305
    %1316 = vmatprep.subr.mxu0 0.0
    %1317 = vmatpush1.msra.mxu0 %v1306
    %1318 = vmatprep.subr.mxu0 0.0
    %1319 = vmatpush1.msra.mxu0 %v1307
    %1320 = vmatprep.subr.mxu0 0.0
    %1321 = vmatpush1.msra.mxu0 0.0
    %1322 = vmatprep.subr.mxu0 0.0
    %1323 = vmatpush1.msra.mxu0 0.0
    %1324 = vmatprep.subr.mxu0 0.0
    %1325 = vmatpush1.msra.mxu0 0.0
    %1326 = vmatprep.subr.mxu0 0.0
    %1327 = vmatpush1.msra.mxu0 0.0
    %1328 = vmatprep.subr.mxu0 0.0
    %1329 = vmatpush1.msra.mxu0 0.0
    %1330 = vmatprep.subr.mxu0 0.0
    %1331 = vmatpush1.msra.mxu0 0.0
    %1332 = vmatprep.subr.mxu0 0.0
    %1333 = vmatpush1.msra.mxu0 0.0
    %1334 = vmatprep.subr.mxu0 0.0
    %1335 = vmatpush1.msra.mxu0 0.0
    %1336 = vmatprep.subr.mxu0 0.0
    %1337 = vmatpush1.msra.mxu0 0.0
    %1338 = vmatprep.subr.mxu0 0.0
    %1339 = vmatpush1.msra.mxu0 0.0
    %1340 = vmatprep.subr.mxu0 0.0
    %1341 = vmatpush1.msra.mxu0 0.0
    %1342 = vmatprep.subr.mxu0 0.0
    %1343 = vmatpush1.msra.mxu0 0.0
    %1344 = vmatprep.subr.mxu0 0.0
    %1345 = vmatpush1.msra.mxu0 0.0
    %1346 = vmatprep.subr.mxu0 0.0
    %1347 = vmatpush1.msra.mxu0 0.0
    %1348 = vmatprep.subr.mxu0 0.0
    %1349 = vmatpush1.msra.mxu0 0.0
    %1350 = vmatprep.subr.mxu0 0.0
    %1351 = vmatpush1.msra.mxu0 0.0
    %1352 = vmatprep.subr.mxu0 0.0
    %1353 = vmatpush1.msra.mxu0 0.0
    %1354 = vmatprep.subr.mxu0 0.0
    %1355 = vmatpush1.msra.mxu0 0.0
    %1356 = vmatprep.subr.mxu0 0.0
    %1357 = vmatpush1.msra.mxu0 0.0
    %1358 = vmatprep.subr.mxu0 0.0
    %1359 = vmatpush1.msra.mxu0 0.0
    %1360 = vmatprep.subr.mxu0 0.0
    %1361 = vmatpush1.msra.mxu0 0.0
    %1362 = vmatprep.subr.mxu0 0.0
    %1363 = vmatpush1.msra.mxu0 0.0
    %1364 = vmatprep.subr.mxu0 0.0
    %1365 = vmatpush1.msra.mxu0 0.0
    %1366 = vmatprep.subr.mxu0 0.0
    %1367 = vmatpush1.msra.mxu0 0.0
    %1368 = vmatprep.subr.mxu0 0.0
    %1369 = vmatpush1.msra.mxu0 0.0
    %1370 = vmatprep.subr.mxu0 0.0
    %1371 = vmatpush1.msra.mxu0 0.0
    %1372 = vmatprep.subr.mxu0 0.0
    %1373 = vmatpush1.msra.mxu0 0.0
    %1374 = vmatprep.subr.mxu0 0.0
    %1375 = vmatpush1.msra.mxu0 0.0
    %1376 = vmatprep.mubr.f32.mxu0 0.0
    %1377 = vmatmul.mubr.f32.gmra.mrb[0].mxu0 %v1310
    %v1378 = vpop.f32.mrb[0].mxu0
    %v1379 = vadd.f32 0.0, %v1378
    %v1380 = vpop.f32.mrb[0].mxu0
    %1381 = vmatprep.mubr.f32.mxu0 0.0
    %1382 = vmatmul.mubr.f32.gmra.mrb[0].mxu0 %v1310
    %v1383 = vpop.f32.mrb[0].mxu0
    %v1384 = vadd.f32 0.0, %v1383
    %v1385 = vpop.f32.mrb[0].mxu0
    %1386 = vdwg.mxu0
    %v1387 = vadd.f32 %v1299, %v1379
    %v1388 = vadd.f32 %v1300, %v1384
    %v1389 = vxor.u32 %v1387, 2147483648
    %v1390 = vxor.u32 %v1388, 2147483648
    %v1391 = vmul.f32 %v1389, 1.442695
    %v1392 = vpow.pop %v1391
    %v1393 = vmul.f32 %v1390, 1.442695
    %v1394 = vpow.pop %v1393
    %v1395 = vadd.f32 %v1392, 1.0
    %v1396 = vadd.f32 %v1394, 1.0
    %v1397 = vrcp.pop %v1395
    %v1398 = vmul.f32 1.0, %v1397
    %v1399 = vrcp.pop %v1396
    %v1400 = vmul.f32 1.0, %v1399
    %v1401 = vtanh.pop %v1387
    %v1402 = vtanh.pop %v1388
    %v1403 = vmul.f32 %v1398, 0.0
    %v1404 = vmul.f32 %v1400, 0.0
    %1407 = vrot.lane.b32.xlu0 %v1401, 64
    %v1408 = vpop.permute.xlu0 %1407
    %1409 = vrot.lane.b32.xlu0 %v1402, 64
    %v1410 = vpop.permute.xlu0 %1409
    %v1413 = vmul.f32 %v1398, %v1408
    %v1414 = vmul.f32 %v1400, %v1410
    %1417 = vrot.lane.b32.xlu0 %v1413, 32
    %v1418 = vpop.permute.xlu0 %1417
    %1419 = vrot.lane.b32.xlu0 %v1414, 32
    %v1420 = vpop.permute.xlu0 %1419
    %v1423 = vadd.f32 %v1403, %v1418
    %v1424 = vadd.f32 %v1404, %v1420
    %v1425 = vtanh.pop %v1423
    %v1426 = vtanh.pop %v1424
    %1429 = vrot.lane.b32.xlu0 %v1425, 64
    %v1430 = vpop.permute.xlu0 %1429
    %1431 = vrot.lane.b32.xlu0 %v1426, 64
    %v1432 = vpop.permute.xlu0 %1431
    %v1435 = vmul.f32 %v1398, %v1430
    %v1436 = vmul.f32 %v1400, %v1432
    %1439 = vrot.lane.b32.xlu0 %v1435, 32
    %v1440 = vpop.permute.xlu0 %1439
    %1441 = vrot.lane.b32.xlu0 %v1436, 32
    %v1442 = vpop.permute.xlu0 %1441
    %v1443 = vsel %vm1308, %v1440, 0
    %v1445 = vsel %vm1308, %v1442, 0
    %1447 = vmatprep.subr.mxu0 0.0
    %1448 = vmatpush1.msra.mxu0 %v1304
    %1449 = vmatprep.subr.mxu0 0.0
    %1450 = vmatpush1.msra.mxu0 %v1305
    %1451 = vmatprep.subr.mxu0 0.0
    %1452 = vmatpush1.msra.mxu0 %v1306
    %1453 = vmatprep.subr.mxu0 0.0
    %1454 = vmatpush1.msra.mxu0 %v1307
    %1455 = vmatprep.subr.mxu0 0.0
    %1456 = vmatpush1.msra.mxu0 0.0
    %1457 = vmatprep.subr.mxu0 0.0
    %1458 = vmatpush1.msra.mxu0 0.0
    %1459 = vmatprep.subr.mxu0 0.0
    %1460 = vmatpush1.msra.mxu0 0.0
    %1461 = vmatprep.subr.mxu0 0.0
    %1462 = vmatpush1.msra.mxu0 0.0
    %1463 = vmatprep.subr.mxu0 0.0
    %1464 = vmatpush1.msra.mxu0 0.0
    %1465 = vmatprep.subr.mxu0 0.0
    %1466 = vmatpush1.msra.mxu0 0.0
    %1467 = vmatprep.subr.mxu0 0.0
    %1468 = vmatpush1.msra.mxu0 0.0
    %1469 = vmatprep.subr.mxu0 0.0
    %1470 = vmatpush1.msra.mxu0 0.0
    %1471 = vmatprep.subr.mxu0 0.0
    %1472 = vmatpush1.msra.mxu0 0.0
    %1473 = vmatprep.subr.mxu0 0.0
    %1474 = vmatpush1.msra.mxu0 0.0
    %1475 = vmatprep.subr.mxu0 0.0
    %1476 = vmatpush1.msra.mxu0 0.0
    %1477 = vmatprep.subr.mxu0 0.0
    %1478 = vmatpush1.msra.mxu0 0.0
    %1479 = vmatprep.subr.mxu0 0.0
    %1480 = vmatpush1.msra.mxu0 0.0
    %1481 = vmatprep.subr.mxu0 0.0
    %1482 = vmatpush1.msra.mxu0 0.0
    %1483 = vmatprep.subr.mxu0 0.0
    %1484 = vmatpush1.msra.mxu0 0.0
    %1485 = vmatprep.subr.mxu0 0.0
    %1486 = vmatpush1.msra.mxu0 0.0
    %1487 = vmatprep.subr.mxu0 0.0
    %1488 = vmatpush1.msra.mxu0 0.0
    %1489 = vmatprep.subr.mxu0 0.0
    %1490 = vmatpush1.msra.mxu0 0.0
    %1491 = vmatprep.subr.mxu0 0.0
    %1492 = vmatpush1.msra.mxu0 0.0
    %1493 = vmatprep.subr.mxu0 0.0
    %1494 = vmatpush1.msra.mxu0 0.0
    %1495 = vmatprep.subr.mxu0 0.0
    %1496 = vmatpush1.msra.mxu0 0.0
    %1497 = vmatprep.subr.mxu0 0.0
    %1498 = vmatpush1.msra.mxu0 0.0
    %1499 = vmatprep.subr.mxu0 0.0
    %1500 = vmatpush1.msra.mxu0 0.0
    %1501 = vmatprep.subr.mxu0 0.0
    %1502 = vmatpush1.msra.mxu0 0.0
    %1503 = vmatprep.subr.mxu0 0.0
    %1504 = vmatpush1.msra.mxu0 0.0
    %1505 = vmatprep.subr.mxu0 0.0
    %1506 = vmatpush1.msra.mxu0 0.0
    %1507 = vmatprep.subr.mxu0 0.0
    %1508 = vmatpush1.msra.mxu0 0.0
    %1509 = vmatprep.subr.mxu0 0.0
    %1510 = vmatpush1.msra.mxu0 0.0
    %1511 = vmatprep.mubr.f32.mxu0 0.0
    %1512 = vmatmul.mubr.f32.gmra.mrb[0].mxu0 %v1443
    %v1513 = vpop.f32.mrb[0].mxu0
    %v1514 = vadd.f32 0.0, %v1513
    %v1515 = vpop.f32.mrb[0].mxu0
    %1516 = vmatprep.mubr.f32.mxu0 0.0
    %1517 = vmatmul.mubr.f32.gmra.mrb[0].mxu0 %v1445
    %v1518 = vpop.f32.mrb[0].mxu0
    %v1519 = vadd.f32 0.0, %v1518
    %v1520 = vpop.f32.mrb[0].mxu0
    %1521 = vdwg.mxu0
    %vm1524 = vcmask 1041408
    %v1525 = vrot.slane %v1514, 6
    %v1526 = vrot.slane %v1519, 6
    %v1527 = vsel %vm1524, %v1525, %v1526
    %v1530 = vadd.f32 %v1300, %v1525
    %v1531 = vadd.f32 %v1301, %v1527
    %v1532 = vxor.u32 %v1530, 2147483648
    %v1533 = vxor.u32 %v1531, 2147483648
    %v1534 = vmul.f32 %v1532, 1.442695
    %v1535 = vpow.pop %v1534
    %v1536 = vmul.f32 %v1533, 1.442695
    %v1537 = vpow.pop %v1536
    %v1538 = vadd.f32 %v1535, 1.0
    %v1539 = vadd.f32 %v1537, 1.0
    %v1540 = vrcp.pop %v1538
    %v1541 = vmul.f32 1.0, %v1540
    %v1542 = vrcp.pop %v1539
    %v1543 = vmul.f32 1.0, %v1542
    %v1544 = vtanh.pop %v1530
    %v1545 = vtanh.pop %v1531
    %v1548 = vrot.slane %v1423, 6
    %v1549 = vrot.slane %v1424, 6
    %v1550 = vsel %vm1524, %v1548, %v1549
    %v1553 = vmul.f32 %v1541, %v1548
    %v1554 = vmul.f32 %v1543, %v1550
    %1557 = vrot.lane.b32.xlu0 %v1544, 64
    %v1558 = vpop.permute.xlu0 %1557
    %1559 = vrot.lane.b32.xlu0 %v1545, 64
    %v1560 = vpop.permute.xlu0 %1559
    %v1563 = vmul.f32 %v1541, %v1558
    %v1564 = vmul.f32 %v1543, %v1560
    %1567 = vrot.lane.b32.xlu0 %v1563, 32
    %v1568 = vpop.permute.xlu0 %1567
    %1569 = vrot.lane.b32.xlu0 %v1564, 32
    %v1570 = vpop.permute.xlu0 %1569
    %v1573 = vadd.f32 %v1553, %v1568
    %v1574 = vadd.f32 %v1554, %v1570
    %v1575 = vtanh.pop %v1573
    %v1576 = vtanh.pop %v1574
    %1579 = vrot.lane.b32.xlu0 %v1575, 64
    %v1580 = vpop.permute.xlu0 %1579
    %1581 = vrot.lane.b32.xlu0 %v1576, 64
    %v1582 = vpop.permute.xlu0 %1581
    %v1585 = vmul.f32 %v1541, %v1580
    %v1586 = vmul.f32 %v1543, %v1582
    %vm1589 = vcmask 1045504
    %v1590 = vrot.slane %v1585, 2
    %v1591 = vrot.slane %v1586, 2
    %v1592 = vsel %vm1589, %v1590, %v1591
    %1593 = vrot.lane.b32.xlu0 %v1592, 32
    %v1594 = vpop.permute.xlu0 %1593
    %1595 = vrot.lane.b32.xlu0 %v1591, 32
    %v1596 = vpop.permute.xlu0 %1595
    %v1597 = vsel %vm1308, %v1594, 0
    %v1599 = vsel %vm1308, %v1596, 0
    %1601 = vmatprep.subr.mxu0 0.0
    %1602 = vmatpush1.msra.mxu0 %v1304
    %1603 = vmatprep.subr.mxu0 0.0
    %1604 = vmatpush1.msra.mxu0 %v1305
    %1605 = vmatprep.subr.mxu0 0.0
    %1606 = vmatpush1.msra.mxu0 %v1306
    %1607 = vmatprep.subr.mxu0 0.0
    %1608 = vmatpush1.msra.mxu0 %v1307
    %1609 = vmatprep.subr.mxu0 0.0
    %1610 = vmatpush1.msra.mxu0 0.0
    %1611 = vmatprep.subr.mxu0 0.0
    %1612 = vmatpush1.msra.mxu0 0.0
    %1613 = vmatprep.subr.mxu0 0.0
    %1614 = vmatpush1.msra.mxu0 0.0
    %1615 = vmatprep.subr.mxu0 0.0
    %1616 = vmatpush1.msra.mxu0 0.0
    %1617 = vmatprep.subr.mxu0 0.0
    %1618 = vmatpush1.msra.mxu0 0.0
    %1619 = vmatprep.subr.mxu0 0.0
    %1620 = vmatpush1.msra.mxu0 0.0
    %1621 = vmatprep.subr.mxu0 0.0
    %1622 = vmatpush1.msra.mxu0 0.0
    %1623 = vmatprep.subr.mxu0 0.0
    %1624 = vmatpush1.msra.mxu0 0.0
    %1625 = vmatprep.subr.mxu0 0.0
    %1626 = vmatpush1.msra.mxu0 0.0
    %1627 = vmatprep.subr.mxu0 0.0
    %1628 = vmatpush1.msra.mxu0 0.0
    %1629 = vmatprep.subr.mxu0 0.0
    %1630 = vmatpush1.msra.mxu0 0.0
    %1631 = vmatprep.subr.mxu0 0.0
    %1632 = vmatpush1.msra.mxu0 0.0
    %1633 = vmatprep.subr.mxu0 0.0
    %1634 = vmatpush1.msra.mxu0 0.0
    %1635 = vmatprep.subr.mxu0 0.0
    %1636 = vmatpush1.msra.mxu0 0.0
    %1637 = vmatprep.subr.mxu0 0.0
    %1638 = vmatpush1.msra.mxu0 0.0
    %1639 = vmatprep.subr.mxu0 0.0
    %1640 = vmatpush1.msra.mxu0 0.0
    %1641 = vmatprep.subr.mxu0 0.0
    %1642 = vmatpush1.msra.mxu0 0.0
    %1643 = vmatprep.subr.mxu0 0.0
    %1644 = vmatpush1.msra.mxu0 0.0
    %1645 = vmatprep.subr.mxu0 0.0
    %1646 = vmatpush1.msra.mxu0 0.0
    %1647 = vmatprep.subr.mxu0 0.0
    %1648 = vmatpush1.msra.mxu0 0.0
    %1649 = vmatprep.subr.mxu0 0.0
    %1650 = vmatpush1.msra.mxu0 0.0
    %1651 = vmatprep.subr.mxu0 0.0
    %1652 = vmatpush1.msra.mxu0 0.0
    %1653 = vmatprep.subr.mxu0 0.0
    %1654 = vmatpush1.msra.mxu0 0.0
    %1655 = vmatprep.subr.mxu0 0.0
    %1656 = vmatpush1.msra.mxu0 0.0
    %1657 = vmatprep.subr.mxu0 0.0
    %1658 = vmatpush1.msra.mxu0 0.0
    %1659 = vmatprep.subr.mxu0 0.0
    %1660 = vmatpush1.msra.mxu0 0.0
    %1661 = vmatprep.subr.mxu0 0.0
    %1662 = vmatpush1.msra.mxu0 0.0
    %1663 = vmatprep.subr.mxu0 0.0
    %1664 = vmatpush1.msra.mxu0 0.0
    %1665 = vmatprep.mubr.f32.mxu0 0.0
    %1666 = vmatmul.mubr.f32.gmra.mrb[0].mxu0 %v1597
    %v1667 = vpop.f32.mrb[0].mxu0
    %v1668 = vadd.f32 0.0, %v1667
    %v1669 = vpop.f32.mrb[0].mxu0
    %1670 = vmatprep.mubr.f32.mxu0 0.0
    %1671 = vmatmul.mubr.f32.gmra.mrb[0].mxu0 %v1599
    %v1672 = vpop.f32.mrb[0].mxu0
    %v1673 = vadd.f32 0.0, %v1672
    %v1674 = vpop.f32.mrb[0].mxu0
    %1675 = vdwg.mxu0
    %vm1678 = vcmask 1043456
    %v1679 = vrot.slane %v1668, 4
    %v1680 = vrot.slane %v1673, 4
    %v1681 = vsel %vm1678, %v1679, %v1680
    %v1684 = vadd.f32 %v1301, %v1679
    %v1685 = vadd.f32 %v1302, %v1681
    %v1686 = vxor.u32 %v1684, 2147483648
    %v1687 = vxor.u32 %v1685, 2147483648
    %v1688 = vmul.f32 %v1686, 1.442695
    %v1689 = vpow.pop %v1688
    %v1690 = vmul.f32 %v1687, 1.442695
    %v1691 = vpow.pop %v1690
    %v1692 = vadd.f32 %v1689, 1.0
    %v1693 = vadd.f32 %v1691, 1.0
    %v1694 = vrcp.pop %v1692
    %v1695 = vmul.f32 1.0, %v1694
    %v1696 = vrcp.pop %v1693
    %v1697 = vmul.f32 1.0, %v1696
    %v1698 = vtanh.pop %v1684
    %v1699 = vtanh.pop %v1685
    %v1702 = vrot.slane %v1573, 6
    %v1703 = vrot.slane %v1574, 6
    %v1704 = vsel %vm1524, %v1702, %v1703
    %v1707 = vmul.f32 %v1695, %v1702
    %v1708 = vmul.f32 %v1697, %v1704
    %1711 = vrot.lane.b32.xlu0 %v1698, 64
    %v1712 = vpop.permute.xlu0 %1711
    %1713 = vrot.lane.b32.xlu0 %v1699, 64
    %v1714 = vpop.permute.xlu0 %1713
    %v1717 = vmul.f32 %v1695, %v1712
    %v1718 = vmul.f32 %v1697, %v1714
    %1721 = vrot.lane.b32.xlu0 %v1717, 32
    %v1722 = vpop.permute.xlu0 %1721
    %1723 = vrot.lane.b32.xlu0 %v1718, 32
    %v1724 = vpop.permute.xlu0 %1723
    %v1727 = vadd.f32 %v1707, %v1722
    %v1728 = vadd.f32 %v1708, %v1724
    %v1729 = vtanh.pop %v1727
    %v1730 = vtanh.pop %v1728
    %1733 = vrot.lane.b32.xlu0 %v1729, 64
    %v1734 = vpop.permute.xlu0 %1733
    %1735 = vrot.lane.b32.xlu0 %v1730, 64
    %v1736 = vpop.permute.xlu0 %1735
    %v1739 = vmul.f32 %v1695, %v1734
    %v1740 = vmul.f32 %v1697, %v1736
    %v1743 = vrot.slane %v1739, 4
    %v1744 = vrot.slane %v1740, 4
    %v1745 = vsel %vm1678, %v1743, %v1744
    %1746 = vrot.lane.b32.xlu0 %v1745, 32
    %v1747 = vpop.permute.xlu0 %1746
    %1748 = vrot.lane.b32.xlu0 %v1744, 32
    %v1749 = vpop.permute.xlu0 %1748
    %v1750 = vsel %vm1308, %v1747, 0
    %v1752 = vsel %vm1308, %v1749, 0
    %1754 = vmatprep.subr.mxu0 0.0
    %1755 = vmatpush1.msra.mxu0 %v1304
    %1756 = vmatprep.subr.mxu0 0.0
    %1757 = vmatpush1.msra.mxu0 %v1305
    %1758 = vmatprep.subr.mxu0 0.0
    %1759 = vmatpush1.msra.mxu0 %v1306
    %1760 = vmatprep.subr.mxu0 0.0
    %1761 = vmatpush1.msra.mxu0 %v1307
    %1762 = vmatprep.subr.mxu0 0.0
    %1763 = vmatpush1.msra.mxu0 0.0
    %1764 = vmatprep.subr.mxu0 0.0
    %1765 = vmatpush1.msra.mxu0 0.0
    %1766 = vmatprep.subr.mxu0 0.0
    %1767 = vmatpush1.msra.mxu0 0.0
    %1768 = vmatprep.subr.mxu0 0.0
    %1769 = vmatpush1.msra.mxu0 0.0
    %1770 = vmatprep.subr.mxu0 0.0
    %1771 = vmatpush1.msra.mxu0 0.0
    %1772 = vmatprep.subr.mxu0 0.0
    %1773 = vmatpush1.msra.mxu0 0.0
    %1774 = vmatprep.subr.mxu0 0.0
    %1775 = vmatpush1.msra.mxu0 0.0
    %1776 = vmatprep.subr.mxu0 0.0
    %1777 = vmatpush1.msra.mxu0 0.0
    %1778 = vmatprep.subr.mxu0 0.0
    %1779 = vmatpush1.msra.mxu0 0.0
    %1780 = vmatprep.subr.mxu0 0.0
    %1781 = vmatpush1.msra.mxu0 0.0
    %1782 = vmatprep.subr.mxu0 0.0
    %1783 = vmatpush1.msra.mxu0 0.0
    %1784 = vmatprep.subr.mxu0 0.0
    %1785 = vmatpush1.msra.mxu0 0.0
    %1786 = vmatprep.subr.mxu0 0.0
    %1787 = vmatpush1.msra.mxu0 0.0
    %1788 = vmatprep.subr.mxu0 0.0
    %1789 = vmatpush1.msra.mxu0 0.0
    %1790 = vmatprep.subr.mxu0 0.0
    %1791 = vmatpush1.msra.mxu0 0.0
    %1792 = vmatprep.subr.mxu0 0.0
    %1793 = vmatpush1.msra.mxu0 0.0
    %1794 = vmatprep.subr.mxu0 0.0
    %1795 = vmatpush1.msra.mxu0 0.0
    %1796 = vmatprep.subr.mxu0 0.0
    %1797 = vmatpush1.msra.mxu0 0.0
    %1798 = vmatprep.subr.mxu0 0.0
    %1799 = vmatpush1.msra.mxu0 0.0
    %1800 = vmatprep.subr.mxu0 0.0
    %1801 = vmatpush1.msra.mxu0 0.0
    %1802 = vmatprep.subr.mxu0 0.0
    %1803 = vmatpush1.msra.mxu0 0.0
    %1804 = vmatprep.subr.mxu0 0.0
    %1805 = vmatpush1.msra.mxu0 0.0
    %1806 = vmatprep.subr.mxu0 0.0
    %1807 = vmatpush1.msra.mxu0 0.0
    %1808 = vmatprep.subr.mxu0 0.0
    %1809 = vmatpush1.msra.mxu0 0.0
    %1810 = vmatprep.subr.mxu0 0.0
    %1811 = vmatpush1.msra.mxu0 0.0
    %1812 = vmatprep.subr.mxu0 0.0
    %1813 = vmatpush1.msra.mxu0 0.0
    %1814 = vmatprep.subr.mxu0 0.0
    %1815 = vmatpush1.msra.mxu0 0.0
    %1816 = vmatprep.subr.mxu0 0.0
    %1817 = vmatpush1.msra.mxu0 0.0
    %1818 = vmatprep.mubr.f32.mxu0 0.0
    %1819 = vmatmul.mubr.f32.gmra.mrb[0].mxu0 %v1750
    %v1820 = vpop.f32.mrb[0].mxu0
    %v1821 = vadd.f32 0.0, %v1820
    %v1822 = vpop.f32.mrb[0].mxu0
    %1823 = vmatprep.mubr.f32.mxu0 0.0
    %1824 = vmatmul.mubr.f32.gmra.mrb[0].mxu0 %v1752
    %v1825 = vpop.f32.mrb[0].mxu0
    %v1826 = vadd.f32 0.0, %v1825
    %v1827 = vpop.f32.mrb[0].mxu0
    %1828 = vdwg.mxu0
    %v1831 = vrot.slane %v1821, 2
    %v1832 = vrot.slane %v1826, 2
    %v1833 = vsel %vm1589, %v1831, %v1832
    %v1836 = vadd.f32 %v1302, %v1831
    %v1837 = vadd.f32 %v1303, %v1833
    %v1838 = vxor.u32 %v1836, 2147483648
    %v1839 = vxor.u32 %v1837, 2147483648
    %v1840 = vmul.f32 %v1838, 1.442695
    %v1841 = vpow.pop %v1840
    %v1842 = vmul.f32 %v1839, 1.442695
    %v1843 = vpow.pop %v1842
    %v1844 = vadd.f32 %v1841, 1.0
    %v1845 = vadd.f32 %v1843, 1.0
    %v1846 = vrcp.pop %v1844
    %v1847 = vmul.f32 1.0, %v1846
    %v1848 = vrcp.pop %v1845
    %v1849 = vmul.f32 1.0, %v1848
    %v1850 = vtanh.pop %v1836
    %v1851 = vtanh.pop %v1837
    %v1854 = vrot.slane %v1727, 6
    %v1855 = vrot.slane %v1728, 6
    %v1856 = vsel %vm1524, %v1854, %v1855
    %v1859 = vmul.f32 %v1847, %v1854
    %v1860 = vmul.f32 %v1849, %v1856
    %1863 = vrot.lane.b32.xlu0 %v1850, 64
    %v1864 = vpop.permute.xlu0 %1863
    %1865 = vrot.lane.b32.xlu0 %v1851, 64
    %v1866 = vpop.permute.xlu0 %1865
    %v1869 = vmul.f32 %v1847, %v1864
    %v1870 = vmul.f32 %v1849, %v1866
    %1873 = vrot.lane.b32.xlu0 %v1869, 32
    %v1874 = vpop.permute.xlu0 %1873
    %1875 = vrot.lane.b32.xlu0 %v1870, 32
    %v1876 = vpop.permute.xlu0 %1875
    %v1879 = vadd.f32 %v1859, %v1874
    %v1880 = vadd.f32 %v1860, %v1876
    %v1881 = vtanh.pop %v1879
    %v1882 = vtanh.pop %v1880
    %1885 = vrot.lane.b32.xlu0 %v1881, 64
    %v1886 = vpop.permute.xlu0 %1885
    %1887 = vrot.lane.b32.xlu0 %v1882, 64
    %v1888 = vpop.permute.xlu0 %1887
    %v1891 = vmul.f32 %v1847, %v1886
    %v1892 = vmul.f32 %v1849, %v1888
    %v1893 = vsel %vm1524, %v1436, %v1585
    %v1894 = vsel %vm1678, %v1586, %v1739
    %v1895 = vsel %vm1589, %v1740, %v1891
    %v1896 = vld [vmem:[%s9] sm:$0xff]
    %v1897 = vld [vmem:[%s9 + $0x8] sm:$0xff]
    %v1898 = vld [vmem:[%s9 + $0x10] sm:$0xff]
    %v1899 = vld [vmem:[%s9 + $0x18] sm:$0xff]
    %v1900 = vld [vmem:[#allocation6] sm:$0x1]
    %v1902 = vlaneseq
    %v1903 = vshrl.u32 %v1902, 7
    %v1904 = vsub.s32 0, %v1903
    %v1905 = vrot.slane %v1900, %v1904
    %1911 = vrot.lane.b32.xlu0 %v1893, 32
    %v1912 = vpop.permute.xlu0 %1911
    %1913 = vrot.lane.b32.xlu0 %v1894, 32
    %v1914 = vpop.permute.xlu0 %1913
    %1915 = vrot.lane.b32.xlu0 %v1895, 32
    %v1916 = vpop.permute.xlu0 %1915
    %1917 = vrot.lane.b32.xlu0 %v1892, 32
    %v1918 = vpop.permute.xlu0 %1917
    %v1919 = vsel %vm1308, %v1912, 0
    %v1921 = vsel %vm1308, %v1914, 0
    %v1923 = vsel %vm1308, %v1916, 0
    %v1925 = vsel %vm1308, %v1918, 0
    %1927 = vmatprep.subr.mxu0 0.0
    %1928 = vmatpush1.msra.mxu0 %v1896
    %1929 = vmatprep.subr.mxu0 0.0
    %1930 = vmatpush1.msra.mxu0 %v1897
    %1931 = vmatprep.subr.mxu0 0.0
    %1932 = vmatpush1.msra.mxu0 %v1898
    %1933 = vmatprep.subr.mxu0 0.0
    %1934 = vmatpush1.msra.mxu0 %v1899
    %1935 = vmatprep.subr.mxu0 0.0
    %1936 = vmatpush1.msra.mxu0 0.0
    %1937 = vmatprep.subr.mxu0 0.0
    %1938 = vmatpush1.msra.mxu0 0.0
    %1939 = vmatprep.subr.mxu0 0.0
    %1940 = vmatpush1.msra.mxu0 0.0
    %1941 = vmatprep.subr.mxu0 0.0
    %1942 = vmatpush1.msra.mxu0 0.0
    %1943 = vmatprep.subr.mxu0 0.0
    %1944 = vmatpush1.msra.mxu0 0.0
    %1945 = vmatprep.subr.mxu0 0.0
    %1946 = vmatpush1.msra.mxu0 0.0
    %1947 = vmatprep.subr.mxu0 0.0
    %1948 = vmatpush1.msra.mxu0 0.0
    %1949 = vmatprep.subr.mxu0 0.0
    %1950 = vmatpush1.msra.mxu0 0.0
    %1951 = vmatprep.subr.mxu0 0.0
    %1952 = vmatpush1.msra.mxu0 0.0
    %1953 = vmatprep.subr.mxu0 0.0
    %1954 = vmatpush1.msra.mxu0 0.0
    %1955 = vmatprep.subr.mxu0 0.0
    %1956 = vmatpush1.msra.mxu0 0.0
    %1957 = vmatprep.subr.mxu0 0.0
    %1958 = vmatpush1.msra.mxu0 0.0
    %1959 = vmatprep.subr.mxu0 0.0
    %1960 = vmatpush1.msra.mxu0 0.0
    %1961 = vmatprep.subr.mxu0 0.0
    %1962 = vmatpush1.msra.mxu0 0.0
    %1963 = vmatprep.subr.mxu0 0.0
    %1964 = vmatpush1.msra.mxu0 0.0
    %1965 = vmatprep.subr.mxu0 0.0
    %1966 = vmatpush1.msra.mxu0 0.0
    %1967 = vmatprep.subr.mxu0 0.0
    %1968 = vmatpush1.msra.mxu0 0.0
    %1969 = vmatprep.subr.mxu0 0.0
    %1970 = vmatpush1.msra.mxu0 0.0
    %1971 = vmatprep.subr.mxu0 0.0
    %1972 = vmatpush1.msra.mxu0 0.0
    %1973 = vmatprep.subr.mxu0 0.0
    %1974 = vmatpush1.msra.mxu0 0.0
    %1975 = vmatprep.subr.mxu0 0.0
    %1976 = vmatpush1.msra.mxu0 0.0
    %1977 = vmatprep.subr.mxu0 0.0
    %1978 = vmatpush1.msra.mxu0 0.0
    %1979 = vmatprep.subr.mxu0 0.0
    %1980 = vmatpush1.msra.mxu0 0.0
    %1981 = vmatprep.subr.mxu0 0.0
    %1982 = vmatpush1.msra.mxu0 0.0
    %1983 = vmatprep.subr.mxu0 0.0
    %1984 = vmatpush1.msra.mxu0 0.0
    %1985 = vmatprep.subr.mxu0 0.0
    %1986 = vmatpush1.msra.mxu0 0.0
    %1987 = vmatprep.subr.mxu0 0.0
    %1988 = vmatpush1.msra.mxu0 0.0
    %1989 = vmatprep.subr.mxu0 0.0
    %1990 = vmatpush1.msra.mxu0 0.0
    %1991 = vmatprep.mubr.f32.mxu0 0.0
    %1992 = vmatmul.mubr.f32.gmra.mrb[0].mxu0 %v1443
    %v1993 = vpop.f32.mrb[0].mxu0
    %v1994 = vadd.f32 %v1905, %v1993
    %v1995 = vpop.f32.mrb[0].mxu0
    %1996 = vmatprep.mubr.f32.mxu0 0.0
    %1997 = vmatmul.mubr.f32.gmra.mrb[0].mxu0 %v1919
    %v1998 = vpop.f32.mrb[0].mxu0
    %v1999 = vadd.f32 %v1905, %v1998
    %v2000 = vpop.f32.mrb[0].mxu0
    %2001 = vmatprep.mubr.f32.mxu0 0.0
    %2002 = vmatmul.mubr.f32.gmra.mrb[0].mxu0 %v1921
    %v2003 = vpop.f32.mrb[0].mxu0
    %v2004 = vadd.f32 %v1905, %v2003
    %v2005 = vpop.f32.mrb[0].mxu0
    %2006 = vmatprep.mubr.f32.mxu0 0.0
    %2007 = vmatmul.mubr.f32.gmra.mrb[0].mxu0 %v1923
    %v2008 = vpop.f32.mrb[0].mxu0
    %v2009 = vadd.f32 %v1905, %v2008
    %v2010 = vpop.f32.mrb[0].mxu0
    %2011 = vmatprep.mubr.f32.mxu0 0.0
    %2012 = vmatmul.mubr.f32.gmra.mrb[0].mxu0 %v1925
    %v2013 = vpop.f32.mrb[0].mxu0
    %v2014 = vadd.f32 %v1905, %v2013
    %v2015 = vpop.f32.mrb[0].mxu0
    %2016 = vdwg.mxu0
    %v2017 = vsel %vm84, %v1994, -inf
    %2018 = vmax.xlane.f32.xlu0 %v2017
    %v2019 = vpop.xlane.xlu0 %2018
    %v2020 = vsel %vm84, %v1999, -inf
    %2021 = vmax.xlane.f32.xlu0 %v2020
    %v2022 = vpop.xlane.xlu0 %2021
    %v2023 = vsel %vm84, %v2004, -inf
    %2024 = vmax.xlane.f32.xlu0 %v2023
    %v2025 = vpop.xlane.xlu0 %2024
    %v2026 = vsel %vm84, %v2009, -inf
    %2027 = vmax.xlane.f32.xlu0 %v2026
    %v2028 = vpop.xlane.xlu0 %2027
    %v2029 = vsel %vm84, %v2014, -inf
    %2030 = vmax.xlane.f32.xlu0 %v2029
    %v2031 = vpop.xlane.xlu0 %2030
    %v2032 = vsub.f32 %v1994, %v2019
    %v2033 = vsub.f32 %v1999, %v2022
    %v2034 = vsub.f32 %v2004, %v2025
    %v2035 = vsub.f32 %v2009, %v2028
    %v2036 = vsub.f32 %v2014, %v2031
    %v2037 = vmul.f32 %v2032, 1.442695
    %v2038 = vpow.pop %v2037
    %v2039 = vmul.f32 %v2033, 1.442695
    %v2040 = vpow.pop %v2039
    %v2041 = vmul.f32 %v2034, 1.442695
    %v2042 = vpow.pop %v2041
    %v2043 = vmul.f32 %v2035, 1.442695
    %v2044 = vpow.pop %v2043
    %v2045 = vmul.f32 %v2036, 1.442695
    %v2046 = vpow.pop %v2045
    %v2047 = vsel %vm84, %v2038, 0.0
    %2048 = vadd.xlane.f32.xlu0 %v2047
    %v2049 = vpop.xlane.xlu0 %2048
    %v2050 = vsel %vm84, %v2040, 0.0
    %2051 = vadd.xlane.f32.xlu0 %v2050
    %v2052 = vpop.xlane.xlu0 %2051
    %v2053 = vsel %vm84, %v2042, 0.0
    %2054 = vadd.xlane.f32.xlu0 %v2053
    %v2055 = vpop.xlane.xlu0 %2054
    %v2056 = vsel %vm84, %v2044, 0.0
    %2057 = vadd.xlane.f32.xlu0 %v2056
    %v2058 = vpop.xlane.xlu0 %2057
    %v2059 = vsel %vm84, %v2046, 0.0
    %2060 = vadd.xlane.f32.xlu0 %v2059
    %v2061 = vpop.xlane.xlu0 %2060
    %v2062 = vlog2.pop %v2049
    %v2063 = vmul.f32 %v2062, 0.6931472
    %v2064 = vlog2.pop %v2052
    %v2065 = vmul.f32 %v2064, 0.6931472
    %v2066 = vlog2.pop %v2055
    %v2067 = vmul.f32 %v2066, 0.6931472
    %v2068 = vlog2.pop %v2058
    %v2069 = vmul.f32 %v2068, 0.6931472
    %v2070 = vlog2.pop %v2061
    %v2071 = vmul.f32 %v2070, 0.6931472
    %v2072 = vsub.f32 %v2032, %v2063
    %v2073 = vsub.f32 %v2033, %v2065
    %v2074 = vsub.f32 %v2034, %v2067
    %v2075 = vsub.f32 %v2035, %v2069
    %v2076 = vsub.f32 %v2036, %v2071
    %2077 = vst.msk [vmem:[%s11] sm:$0xff] %vm84, %v2072
    %2078 = vst.msk [vmem:[%s11 + $0x8] sm:$0xff] %vm84, %v2073
    %2079 = vst.msk [vmem:[%s11 + $0x10] sm:$0xff] %vm84, %v2074
    %2080 = vst.msk [vmem:[%s11 + $0x18] sm:$0xff] %vm84, %v2075
    %2081 = vst.msk [vmem:[%s11 + $0x20] sm:$0xff] %vm84, %v2076
    // Predicated region
    $region58: #{our_model_forward.1} parent=1 // pred_check
      _
    $region59: #{our_model_forward.1} parent=1 // pred_check_branch
      %2083 = sbr.rel (0) target = $region61
    $region60: #{our_model_forward.1} parent=1 // pred_region
      _
    $region61: #{our_model_forward.1} parent=1 // pred_fallthru
      _
    // Predicated region
    $region62: #{our_model_forward.1} parent=1 // pred_check
      _
    $region63: #{our_model_forward.1} parent=1 // pred_check_branch
      %2085 = sbr.rel (0) target = $region65
    $region64: #{our_model_forward.1} parent=1 // pred_region
      _
    $region65: #{our_model_forward.1} parent=1 // pred_fallthru
      _
    %2086 = vsyncpa [#allocation3], 1
    %2087 = vsyncpa [#allocation5], 1

</llo_original>
